<compile_context>
chip_gen: v7x
topology: tpu7x:2x2x1
jax: 0.10.0
libtpu: 0.0.40
codegen_flags: <defaults>
</compile_context>

<pallas_src>
import functools

import jax
import jax.numpy as jnp
from jax.experimental import pallas as pl
from jax.experimental.pallas import tpu as pltpu

NUM_OPS = 5


def _cell_kernel(H, W, steps, w_ref, s0_ref, s1_ref, wp0_ref, wp1_ref, wc_ref,
                 o_ref):
    """One batch image per grid step.

    w_ref:   (E, 5)            f32, SMEM  -- arch weights per edge (1/9 folded into [:,2])
    s0_ref:  (1, C0p, H*W)     f32, VMEM  -- raw s0, channels on sublanes, pixels on lanes
    s1_ref:  (1, C1p, H*W)     f32, VMEM  -- raw s1
    wp0_ref: (Cp, C0p)         f32, VMEM  -- preprocess0 1x1 conv weight
    wp1_ref: (Cp, C1p)         f32, VMEM  -- preprocess1 1x1 conv weight
    wc_ref:  (E, Cp, 9*Cp)     f32, VMEM  -- per-edge conv_3x3 weight, [co,(kh*3+kw)*Cp+ci]
    o_ref:   (1, steps*Cp, H*W) f32, VMEM -- concat of the `steps` meta-node outputs
    """
    Cp = wp0_ref.shape[0]
    HW = H * W
    NEG_INF = float("-inf")

    # Border masks for the flattened pixel index p = y*W + x (lanes). Computed
    # once and shared by every MixedOp edge.
    lane = jax.lax.broadcasted_iota(jnp.int32, (Cp, HW), 1)
    if (W & (W - 1)) == 0:                                  # power-of-two width
        col = jnp.bitwise_and(lane, W - 1)
    else:                                                   # avoid vector int div
        lf = lane.astype(jnp.float32)
        col = (lf - W * jnp.floor(lf * (1.0 / W))).astype(jnp.int32)
    at_top = lane < W                 # y == 0
    at_bot = lane >= HW - W           # y == H-1
    at_left = col == 0                # x == 0
    at_right = col == W - 1           # x == W-1

    def lane_roll(a, k):
        # out[:, p] = a[:, (p - k) mod HW]   (jnp.roll semantics, XLU slot)
        return pltpu.roll(a, k % HW, 1)

    def col_m1(a, fill):              # neighbour at (., x-1)
        return jnp.where(at_left, fill, lane_roll(a, 1))

    def col_p1(a, fill):              # neighbour at (., x+1)
        return jnp.where(at_right, fill, lane_roll(a, -1))

    def mixed_op(x, e):
        """Weighted sum of the 5 candidate primitives for edge `e` on state x (Cp, HW)."""
        x_up = lane_roll(x, W)        # pixel (y-1, x); rows y==0 hold wrap-around
        x_dn = lane_roll(x, -W)       # pixel (y+1, x); rows y==H-1 hold wrap-around

        # ---- 9 zero-filled taps; tap (kh, kw) reads pixel (y+kh-1, x+kw-1) ----
        rows = (jnp.where(at_top, 0.0, x_up),   # kh = 0
                x,                              # kh = 1
                jnp.where(at_bot, 0.0, x_dn))   # kh = 2
        taps = []
        for r in rows:
            taps.append(col_m1(r, 0.0))         # kw = 0
            taps.append(r)                      # kw = 1
            taps.append(col_p1(r, 0.0))         # kw = 2

        # op 2: avg_pool_3x3 (count_include_pad=True; /9 folded into w_ref[e, 2])
        pool_sum = taps[0]
        for t in taps[1:]:
            pool_sum = pool_sum + t

        # op 3: max_pool_3x3 with -inf padding (separable rows then columns).
        row_max = jnp.maximum(x, jnp.maximum(jnp.where(at_top, NEG_INF, x_up),
                                             jnp.where(at_bot, NEG_INF, x_dn)))
        pool_max = jnp.maximum(row_max,
                               jnp.maximum(col_m1(row_max, NEG_INF),
                                           col_p1(row_max, NEG_INF)))

        # op 4: conv_3x3 + ReLU — one fused bf16 im2col matmul on the MXU.
        patches = jnp.concatenate(taps, axis=0).astype(jnp.bfloat16)   # (9*Cp, HW)
        conv = jnp.dot(wc_ref[e].astype(jnp.bfloat16), patches,
                       preferred_element_type=jnp.float32)             # (Cp, HW)
        conv = jnp.maximum(conv, 0.0)

        # Weighted op-sum.  op 0 ('none') contributes nothing; op 1 is identity.
        acc = w_ref[e, 1] * x
        acc = acc + w_ref[e, 2] * pool_sum
        acc = acc + w_ref[e, 3] * pool_max
        acc = acc + w_ref[e, 4] * conv
        return acc

    # Preprocess: ReLU -> 1x1 conv (BN affine=False in eval folded to identity).
    s0 = jnp.dot(wp0_ref[...], jnp.maximum(s0_ref[0], 0.0),
                 preferred_element_type=jnp.float32)                   # (Cp, HW)
    s1 = jnp.dot(wp1_ref[...], jnp.maximum(s1_ref[0], 0.0),
                 preferred_element_type=jnp.float32)                   # (Cp, HW)

    # DAG: each meta-node sums one MixedOp per existing state.
    states = [s0, s1]
    edge = 0
    for _ in range(steps):
        node = None
        for h in states:
            contrib = mixed_op(h, edge)
            node = contrib if node is None else node + contrib
            edge += 1
        states.append(node)

    # Channel concat of the last `steps` (meta-node) states.
    o_ref[0] = jnp.concatenate(states[-steps:], axis=0)


def cell_forward(s0_nchw, s1_nchw, weights_normal, w_pre0, w_pre1, w_conv_hwio,
                 *, steps):
    """Cell('normal_normal') forward (eval semantics).

    s0_nchw:        (N, C0, H, W)        float32
    s1_nchw:        (N, C1, H, W)        float32
    weights_normal: (E, NUM_OPS)         float32  per-edge architecture weights
    w_pre0:         (C, C0)              float32  preprocess0 1x1 conv weight
    w_pre1:         (C, C1)              float32  preprocess1 1x1 conv weight
    w_conv_hwio:    (E, 3, 3, C, C)      float32  per-edge conv_3x3 (kh, kw, cin, cout)
    returns:        (N, steps*C, H, W)   float32
    """
    N, C0, H, W = s0_nchw.shape
    _, C1, _, _ = s1_nchw.shape
    C = w_pre0.shape[0]
    E = sum(2 + i for i in range(steps))
    assert weights_normal.shape == (E, NUM_OPS)
    assert w_conv_hwio.shape == (E, 3, 3, C, C)
    HW = H * W

    def _ceil8(c):
        return ((c + 7) // 8) * 8

    C0p, C1p, Cp = _ceil8(C0), _ceil8(C1), _ceil8(C)

    def _pad_c(x, cpad):                       # (N, c, HW) -> (N, cpad, HW)
        c = x.shape[1]
        return x if cpad == c else jnp.pad(x, ((0, 0), (0, cpad - c), (0, 0)))

    # Lane-dense presentation: (N, Cp, H*W) — no transpose, just reshape (+pad C).
    s0 = _pad_c(s0_nchw.astype(jnp.float32).reshape(N, C0, HW), C0p)
    s1 = _pad_c(s1_nchw.astype(jnp.float32).reshape(N, C1, HW), C1p)

    # Preprocess 1x1 conv weights, zero-padded to sublane-aligned shapes.
    wp0 = jnp.pad(w_pre0.astype(jnp.float32), ((0, Cp - C), (0, C0p - C0)))
    wp1 = jnp.pad(w_pre1.astype(jnp.float32), ((0, Cp - C), (0, C1p - C1)))

    # Per-edge conv_3x3 -> (E, Cp, 9*Cp), row = cout, col = (kh*3+kw)*Cp + cin.
    w_oc = jnp.transpose(w_conv_hwio.astype(jnp.float32), (0, 4, 1, 2, 3))
    if Cp != C:
        w_oc = jnp.pad(w_oc, ((0, 0), (0, Cp - C), (0, 0), (0, 0), (0, Cp - C)))
    wc = w_oc.reshape(E, Cp, 9 * Cp)

    # Fold the avg-pool 1/9 into the architecture weights (scalar, free).
    w_k = weights_normal.astype(jnp.float32) * jnp.array(
        [1.0, 1.0, 1.0 / 9.0, 1.0, 1.0], jnp.float32)[None, :]

    kernel = functools.partial(_cell_kernel, H, W, steps)

    out = pl.pallas_call(
        kernel,
        out_shape=jax.ShapeDtypeStruct((N, steps * Cp, HW), jnp.float32),
        grid=(N,),
        in_specs=[
            pl.BlockSpec(memory_space=pltpu.MemorySpace.SMEM),     # arch weights
            pl.BlockSpec((1, C0p, HW), lambda n: (n, 0, 0)),       # s0 image
            pl.BlockSpec((1, C1p, HW), lambda n: (n, 0, 0)),       # s1 image
            pl.BlockSpec((Cp, C0p), lambda n: (0, 0)),             # preprocess0 w
            pl.BlockSpec((Cp, C1p), lambda n: (0, 0)),             # preprocess1 w
            pl.BlockSpec((E, Cp, 9 * Cp), lambda n: (0, 0, 0)),    # conv_3x3 weights
        ],
        out_specs=pl.BlockSpec((1, steps * Cp, HW), lambda n: (n, 0, 0)),
        compiler_params=pltpu.CompilerParams(
            dimension_semantics=("parallel",)),
    )(w_k, s0, s1, wp0, wp1, wc)

    # Drop channel padding per meta-node and restore NCHW.
    out = out.reshape(N, steps, Cp, HW)[:, :, :C, :]
    return out.reshape(N, steps * C, H, W)


def _reference_cell(s0, s1, w_arch, w_pre0, w_pre1, w_conv, *, steps):
    """Pure-JAX reference of the same Cell for verification."""

    def preprocess(x, w):
        # ReLU -> 1x1 conv -> BN(affine=False, eval, fresh stats) == identity.
        return jnp.einsum('nchw,dc->ndhw', jnp.maximum(x, 0.0), w)

    def mixed(x_nchw, w5, wc):
        x = jnp.transpose(x_nchw, (0, 2, 3, 1))
        N, H, W, C = x.shape
        xp = jnp.pad(x, ((0, 0), (1, 1), (1, 1), (0, 0)))
        xn = jnp.pad(x, ((0, 0), (1, 1), (1, 1), (0, 0)),
                     constant_values=-jnp.inf)
        pool_sum = jnp.zeros_like(x)
        pool_max = jnp.full_like(x, -jnp.inf)
        conv = jnp.zeros_like(x)
        for dy in range(3):
            for dx in range(3):
                sl = xp[:, dy:dy + H, dx:dx + W, :]
                pool_sum = pool_sum + sl
                pool_max = jnp.maximum(pool_max, xn[:, dy:dy + H, dx:dx + W, :])
                conv = conv + jnp.einsum('nhwc,cd->nhwd', sl, wc[dy, dx])
        avg = pool_sum / 9.0
        conv = jnp.maximum(conv, 0.0)
        out = w5[1] * x + w5[2] * avg + w5[3] * pool_max + w5[4] * conv
        return jnp.transpose(out, (0, 3, 1, 2))

    s0p = preprocess(s0.astype(jnp.float32), w_pre0)
    s1p = preprocess(s1.astype(jnp.float32), w_pre1)
    states = [s0p, s1p]
    off = 0
    for _ in range(steps):
        node = sum(mixed(h, w_arch[off + j], w_conv[off + j])
                   for j, h in enumerate(states))
        off += len(states)
        states.append(node)
    return jnp.concatenate(states[-steps:], axis=1)


if __name__ == "__main__":
    key = jax.random.PRNGKey(0)
    k_s0, k_s1, k_p0, k_p1, k_c, k_a = jax.random.split(key, 6)

    N, C, H, W = 2, 4, 16, 16
    C_prev_prev, C_prev = 6, 8        # exercises channel padding in preprocess
    steps = 2                          # meta_node_num
    E = sum(2 + i for i in range(steps))   # 5 MixedOp edges

    s0 = jax.random.normal(k_s0, (N, C_prev_prev, H, W), dtype=jnp.float32)
    s1 = jax.random.normal(k_s1, (N, C_prev, H, W), dtype=jnp.float32)

    # Deterministic parameter init.
    w_pre0 = jax.random.normal(k_p0, (C, C_prev_prev), dtype=jnp.float32) * 0.3
    w_pre1 = jax.random.normal(k_p1, (C, C_prev), dtype=jnp.float32) * 0.3
    w_conv = jax.random.normal(k_c, (E, 3, 3, C, C), dtype=jnp.float32) * 0.1
    # Architecture weights (in the search they come from a softmax per edge).
    w_arch = jax.nn.softmax(
        jax.random.normal(k_a, (E, NUM_OPS), dtype=jnp.float32), axis=-1)

    out = cell_forward(s0, s1, w_arch, w_pre0, w_pre1, w_conv, steps=steps)
    out = jax.block_until_ready(out)

    ref = _reference_cell(s0, s1, w_arch, w_pre0, w_pre1, w_conv, steps=steps)
    assert out.shape == (N, steps * C, H, W)
    # Tolerance loosened because the conv_3x3 path uses bf16 MXU operands
    # (f32 accumulation).
    assert jnp.allclose(out, ref, atol=2e-2, rtol=2e-2), "mismatch vs reference"

    print("KERNEL_OK")
</pallas_src>

<mosaic_0001>
module attributes {stable_mosaic.version = 11 : i64} {
  func.func @_cell_kernel(%arg0: i32, %arg1: memref<5x5xf32, #tpu.memory_space<smem>>, %arg2: memref<1x8x256xf32, #tpu.memory_space<vmem>>, %arg3: memref<1x8x256xf32, #tpu.memory_space<vmem>>, %arg4: memref<8x8xf32, #tpu.memory_space<vmem>>, %arg5: memref<8x8xf32, #tpu.memory_space<vmem>>, %arg6: memref<5x8x72xf32, #tpu.memory_space<vmem>>, %arg7: memref<1x16x256xf32, #tpu.memory_space<vmem>>) attributes {dimension_semantics = [#tpu.dimension_semantics<parallel>], iteration_bounds = array<i64: 2>, scalar_prefetch = 0 : i64, scratch_operands = 0 : i64, tpu.core_type = #tpu.core_type<tc>, window_params = [{transform_indices = @transform_0, window_bounds = array<i64: 5, 5>}, {transform_indices = @transform_1, window_bounds = array<i64: 1, 8, 256>}, {transform_indices = @transform_2, window_bounds = array<i64: 1, 8, 256>}, {pipeline_mode = #tpu.pipeline_mode<synchronous>, transform_indices = @transform_3, window_bounds = array<i64: 8, 8>}, {pipeline_mode = #tpu.pipeline_mode<synchronous>, transform_indices = @transform_4, window_bounds = array<i64: 8, 8>}, {pipeline_mode = #tpu.pipeline_mode<synchronous>, transform_indices = @transform_5, window_bounds = array<i64: 5, 8, 72>}, {transform_indices = @transform_6, window_bounds = array<i64: 1, 16, 256>}]} {
    %0 = tpu.iota {dimensions = array<i32: 1>} : vector<8x256xi32>
    %c15_i32 = arith.constant 15 : i32
    %1 = vector.broadcast %c15_i32 : i32 to vector<8x256xi32>
    %2 = arith.andi %0, %1 : vector<8x256xi32>
    %c16_i32 = arith.constant 16 : i32
    %3 = vector.broadcast %c16_i32 : i32 to vector<8x256xi32>
    %4 = arith.cmpi slt, %0, %3 : vector<8x256xi32>
    %c240_i32 = arith.constant 240 : i32
    %5 = vector.broadcast %c240_i32 : i32 to vector<8x256xi32>
    %6 = arith.cmpi sge, %0, %5 : vector<8x256xi32>
    %c0_i32 = arith.constant 0 : i32
    %7 = vector.broadcast %c0_i32 : i32 to vector<8x256xi32>
    %8 = arith.cmpi eq, %2, %7 : vector<8x256xi32>
    %c15_i32_0 = arith.constant 15 : i32
    %9 = vector.broadcast %c15_i32_0 : i32 to vector<8x256xi32>
    %10 = arith.cmpi eq, %2, %9 : vector<8x256xi32>
    %c0 = arith.constant 0 : index
    %c0_1 = arith.constant 0 : index
    %11 = vector.load %arg4[%c0, %c0_1] : memref<8x8xf32, #tpu.memory_space<vmem>>, vector<8x8xf32>
    %c0_2 = arith.constant 0 : index
    %c0_3 = arith.constant 0 : index
    %c0_4 = arith.constant 0 : index
    %12 = vector.load %arg2[%c0_2, %c0_3, %c0_4] : memref<1x8x256xf32, #tpu.memory_space<vmem>>, vector<1x8x256xf32>
    %13 = vector.shape_cast %12 : vector<1x8x256xf32> to vector<8x256xf32>
    %cst = arith.constant 0.000000e+00 : f32
    %14 = vector.broadcast %cst : f32 to vector<8x256xf32>
    %15 = arith.maximumf %13, %14 : vector<8x256xf32>
    %cst_5 = arith.constant dense<0.000000e+00> : vector<8x256xf32>
    %16 = tpu.matmul %11, %15, %cst_5 {dimension_numbers = #tpu.dot_dimension_numbers<[1], [0], [0], [1], [0, 0, 1, 1], [], []>} : vector<8x8xf32>, vector<8x256xf32>, vector<8x256xf32> -> vector<8x256xf32>
    %c0_6 = arith.constant 0 : index
    %c0_7 = arith.constant 0 : index
    %17 = vector.load %arg5[%c0_6, %c0_7] : memref<8x8xf32, #tpu.memory_space<vmem>>, vector<8x8xf32>
    %c0_8 = arith.constant 0 : index
    %c0_9 = arith.constant 0 : index
    %c0_10 = arith.constant 0 : index
    %18 = vector.load %arg3[%c0_8, %c0_9, %c0_10] : memref<1x8x256xf32, #tpu.memory_space<vmem>>, vector<1x8x256xf32>
    %19 = vector.shape_cast %18 : vector<1x8x256xf32> to vector<8x256xf32>
    %cst_11 = arith.constant 0.000000e+00 : f32
    %20 = vector.broadcast %cst_11 : f32 to vector<8x256xf32>
    %21 = arith.maximumf %19, %20 : vector<8x256xf32>
    %cst_12 = arith.constant dense<0.000000e+00> : vector<8x256xf32>
    %22 = tpu.matmul %17, %21, %cst_12 {dimension_numbers = #tpu.dot_dimension_numbers<[1], [0], [0], [1], [0, 0, 1, 1], [], []>} : vector<8x8xf32>, vector<8x256xf32>, vector<8x256xf32> -> vector<8x256xf32>
    %c16_i32_13 = arith.constant 16 : i32
    %23 = tpu.dynamic_rotate %16 by %c16_i32_13 dim 1 : vector<8x256xf32>, i32 -> vector<8x256xf32>
    %c240_i32_14 = arith.constant 240 : i32
    %24 = tpu.dynamic_rotate %16 by %c240_i32_14 dim 1 : vector<8x256xf32>, i32 -> vector<8x256xf32>
    %cst_15 = arith.constant 0.000000e+00 : f32
    %25 = vector.broadcast %cst_15 : f32 to vector<8x256xf32>
    %26 = arith.select %4, %25, %23 : vector<8x256xi1>, vector<8x256xf32>
    %cst_16 = arith.constant 0.000000e+00 : f32
    %27 = vector.broadcast %cst_16 : f32 to vector<8x256xf32>
    %28 = arith.select %6, %27, %24 : vector<8x256xi1>, vector<8x256xf32>
    %c1_i32 = arith.constant 1 : i32
    %29 = tpu.dynamic_rotate %26 by %c1_i32 dim 1 : vector<8x256xf32>, i32 -> vector<8x256xf32>
    %cst_17 = arith.constant 0.000000e+00 : f32
    %30 = vector.broadcast %cst_17 : f32 to vector<8x256xf32>
    %31 = arith.select %8, %30, %29 : vector<8x256xi1>, vector<8x256xf32>
    %c255_i32 = arith.constant 255 : i32
    %32 = tpu.dynamic_rotate %26 by %c255_i32 dim 1 : vector<8x256xf32>, i32 -> vector<8x256xf32>
    %cst_18 = arith.constant 0.000000e+00 : f32
    %33 = vector.broadcast %cst_18 : f32 to vector<8x256xf32>
    %34 = arith.select %10, %33, %32 : vector<8x256xi1>, vector<8x256xf32>
    %c1_i32_19 = arith.constant 1 : i32
    %35 = tpu.dynamic_rotate %16 by %c1_i32_19 dim 1 : vector<8x256xf32>, i32 -> vector<8x256xf32>
    %cst_20 = arith.constant 0.000000e+00 : f32
    %36 = vector.broadcast %cst_20 : f32 to vector<8x256xf32>
    %37 = arith.select %8, %36, %35 : vector<8x256xi1>, vector<8x256xf32>
    %c255_i32_21 = arith.constant 255 : i32
    %38 = tpu.dynamic_rotate %16 by %c255_i32_21 dim 1 : vector<8x256xf32>, i32 -> vector<8x256xf32>
    %cst_22 = arith.constant 0.000000e+00 : f32
    %39 = vector.broadcast %cst_22 : f32 to vector<8x256xf32>
    %40 = arith.select %10, %39, %38 : vector<8x256xi1>, vector<8x256xf32>
    %c1_i32_23 = arith.constant 1 : i32
    %41 = tpu.dynamic_rotate %28 by %c1_i32_23 dim 1 : vector<8x256xf32>, i32 -> vector<8x256xf32>
    %cst_24 = arith.constant 0.000000e+00 : f32
    %42 = vector.broadcast %cst_24 : f32 to vector<8x256xf32>
    %43 = arith.select %8, %42, %41 : vector<8x256xi1>, vector<8x256xf32>
    %c255_i32_25 = arith.constant 255 : i32
    %44 = tpu.dynamic_rotate %28 by %c255_i32_25 dim 1 : vector<8x256xf32>, i32 -> vector<8x256xf32>
    %cst_26 = arith.constant 0.000000e+00 : f32
    %45 = vector.broadcast %cst_26 : f32 to vector<8x256xf32>
    %46 = arith.select %10, %45, %44 : vector<8x256xi1>, vector<8x256xf32>
    %47 = arith.addf %31, %26 : vector<8x256xf32>
    %48 = arith.addf %47, %34 : vector<8x256xf32>
    %49 = arith.addf %48, %37 : vector<8x256xf32>
    %50 = arith.addf %49, %16 : vector<8x256xf32>
    %51 = arith.addf %50, %40 : vector<8x256xf32>
    %52 = arith.addf %51, %43 : vector<8x256xf32>
    %53 = arith.addf %52, %28 : vector<8x256xf32>
    %54 = arith.addf %53, %46 : vector<8x256xf32>
    %cst_27 = arith.constant 0xFF800000 : f32
    %55 = vector.broadcast %cst_27 : f32 to vector<8x256xf32>
    %56 = arith.select %4, %55, %23 : vector<8x256xi1>, vector<8x256xf32>
    %cst_28 = arith.constant 0xFF800000 : f32
    %57 = vector.broadcast %cst_28 : f32 to vector<8x256xf32>
    %58 = arith.select %6, %57, %24 : vector<8x256xi1>, vector<8x256xf32>
    %59 = arith.maximumf %56, %58 : vector<8x256xf32>
    %60 = arith.maximumf %16, %59 : vector<8x256xf32>
    %c1_i32_29 = arith.constant 1 : i32
    %61 = tpu.dynamic_rotate %60 by %c1_i32_29 dim 1 : vector<8x256xf32>, i32 -> vector<8x256xf32>
    %cst_30 = arith.constant 0xFF800000 : f32
    %62 = vector.broadcast %cst_30 : f32 to vector<8x256xf32>
    %63 = arith.select %8, %62, %61 : vector<8x256xi1>, vector<8x256xf32>
    %c255_i32_31 = arith.constant 255 : i32
    %64 = tpu.dynamic_rotate %60 by %c255_i32_31 dim 1 : vector<8x256xf32>, i32 -> vector<8x256xf32>
    %cst_32 = arith.constant 0xFF800000 : f32
    %65 = vector.broadcast %cst_32 : f32 to vector<8x256xf32>
    %66 = arith.select %10, %65, %64 : vector<8x256xi1>, vector<8x256xf32>
    %67 = arith.maximumf %63, %66 : vector<8x256xf32>
    %68 = arith.maximumf %60, %67 : vector<8x256xf32>
    %69 = tpu.concatenate %31, %26, %34, %37, %16, %40, %43, %28, %46 in 0 : vector<8x256xf32>, vector<8x256xf32>, vector<8x256xf32>, vector<8x256xf32>, vector<8x256xf32>, vector<8x256xf32>, vector<8x256xf32>, vector<8x256xf32>, vector<8x256xf32> -> vector<72x256xf32>
    %70 = arith.truncf %69 : vector<72x256xf32> to vector<72x256xbf16>
    %c0_33 = arith.constant 0 : index
    %c0_34 = arith.constant 0 : index
    %c0_35 = arith.constant 0 : index
    %71 = vector.load %arg6[%c0_33, %c0_34, %c0_35] : memref<5x8x72xf32, #tpu.memory_space<vmem>>, vector<1x8x72xf32>
    %72 = vector.shape_cast %71 : vector<1x8x72xf32> to vector<8x72xf32>
    %73 = arith.truncf %72 : vector<8x72xf32> to vector<8x72xbf16>
    %cst_36 = arith.constant dense<0.000000e+00> : vector<8x256xf32>
    %74 = tpu.matmul %73, %70, %cst_36 {dimension_numbers = #tpu.dot_dimension_numbers<[1], [0], [0], [1], [0, 0, 1, 1], [], []>} : vector<8x72xbf16>, vector<72x256xbf16>, vector<8x256xf32> -> vector<8x256xf32>
    %cst_37 = arith.constant 0.000000e+00 : f32
    %75 = vector.broadcast %cst_37 : f32 to vector<8x256xf32>
    %76 = arith.maximumf %74, %75 : vector<8x256xf32>
    %c0_38 = arith.constant 0 : index
    %c1 = arith.constant 1 : index
    %77 = memref.load %arg1[%c0_38, %c1] : memref<5x5xf32, #tpu.memory_space<smem>>
    %78 = vector.broadcast %77 : f32 to vector<8x256xf32>
    %79 = arith.mulf %78, %16 : vector<8x256xf32>
    %c0_39 = arith.constant 0 : index
    %c2 = arith.constant 2 : index
    %80 = memref.load %arg1[%c0_39, %c2] : memref<5x5xf32, #tpu.memory_space<smem>>
    %81 = vector.broadcast %80 : f32 to vector<8x256xf32>
    %82 = arith.mulf %81, %54 : vector<8x256xf32>
    %83 = arith.addf %79, %82 : vector<8x256xf32>
    %c0_40 = arith.constant 0 : index
    %c3 = arith.constant 3 : index
    %84 = memref.load %arg1[%c0_40, %c3] : memref<5x5xf32, #tpu.memory_space<smem>>
    %85 = vector.broadcast %84 : f32 to vector<8x256xf32>
    %86 = arith.mulf %85, %68 : vector<8x256xf32>
    %87 = arith.addf %83, %86 : vector<8x256xf32>
    %c0_41 = arith.constant 0 : index
    %c4 = arith.constant 4 : index
    %88 = memref.load %arg1[%c0_41, %c4] : memref<5x5xf32, #tpu.memory_space<smem>>
    %89 = vector.broadcast %88 : f32 to vector<8x256xf32>
    %90 = arith.mulf %89, %76 : vector<8x256xf32>
    %91 = arith.addf %87, %90 : vector<8x256xf32>
    %c16_i32_42 = arith.constant 16 : i32
    %92 = tpu.dynamic_rotate %22 by %c16_i32_42 dim 1 : vector<8x256xf32>, i32 -> vector<8x256xf32>
    %c240_i32_43 = arith.constant 240 : i32
    %93 = tpu.dynamic_rotate %22 by %c240_i32_43 dim 1 : vector<8x256xf32>, i32 -> vector<8x256xf32>
    %cst_44 = arith.constant 0.000000e+00 : f32
    %94 = vector.broadcast %cst_44 : f32 to vector<8x256xf32>
    %95 = arith.select %4, %94, %92 : vector<8x256xi1>, vector<8x256xf32>
    %cst_45 = arith.constant 0.000000e+00 : f32
    %96 = vector.broadcast %cst_45 : f32 to vector<8x256xf32>
    %97 = arith.select %6, %96, %93 : vector<8x256xi1>, vector<8x256xf32>
    %c1_i32_46 = arith.constant 1 : i32
    %98 = tpu.dynamic_rotate %95 by %c1_i32_46 dim 1 : vector<8x256xf32>, i32 -> vector<8x256xf32>
    %cst_47 = arith.constant 0.000000e+00 : f32
    %99 = vector.broadcast %cst_47 : f32 to vector<8x256xf32>
    %100 = arith.select %8, %99, %98 : vector<8x256xi1>, vector<8x256xf32>
    %c255_i32_48 = arith.constant 255 : i32
    %101 = tpu.dynamic_rotate %95 by %c255_i32_48 dim 1 : vector<8x256xf32>, i32 -> vector<8x256xf32>
    %cst_49 = arith.constant 0.000000e+00 : f32
    %102 = vector.broadcast %cst_49 : f32 to vector<8x256xf32>
    %103 = arith.select %10, %102, %101 : vector<8x256xi1>, vector<8x256xf32>
    %c1_i32_50 = arith.constant 1 : i32
    %104 = tpu.dynamic_rotate %22 by %c1_i32_50 dim 1 : vector<8x256xf32>, i32 -> vector<8x256xf32>
    %cst_51 = arith.constant 0.000000e+00 : f32
    %105 = vector.broadcast %cst_51 : f32 to vector<8x256xf32>
    %106 = arith.select %8, %105, %104 : vector<8x256xi1>, vector<8x256xf32>
    %c255_i32_52 = arith.constant 255 : i32
    %107 = tpu.dynamic_rotate %22 by %c255_i32_52 dim 1 : vector<8x256xf32>, i32 -> vector<8x256xf32>
    %cst_53 = arith.constant 0.000000e+00 : f32
    %108 = vector.broadcast %cst_53 : f32 to vector<8x256xf32>
    %109 = arith.select %10, %108, %107 : vector<8x256xi1>, vector<8x256xf32>
    %c1_i32_54 = arith.constant 1 : i32
    %110 = tpu.dynamic_rotate %97 by %c1_i32_54 dim 1 : vector<8x256xf32>, i32 -> vector<8x256xf32>
    %cst_55 = arith.constant 0.000000e+00 : f32
    %111 = vector.broadcast %cst_55 : f32 to vector<8x256xf32>
    %112 = arith.select %8, %111, %110 : vector<8x256xi1>, vector<8x256xf32>
    %c255_i32_56 = arith.constant 255 : i32
    %113 = tpu.dynamic_rotate %97 by %c255_i32_56 dim 1 : vector<8x256xf32>, i32 -> vector<8x256xf32>
    %cst_57 = arith.constant 0.000000e+00 : f32
    %114 = vector.broadcast %cst_57 : f32 to vector<8x256xf32>
    %115 = arith.select %10, %114, %113 : vector<8x256xi1>, vector<8x256xf32>
    %116 = arith.addf %100, %95 : vector<8x256xf32>
    %117 = arith.addf %116, %103 : vector<8x256xf32>
    %118 = arith.addf %117, %106 : vector<8x256xf32>
    %119 = arith.addf %118, %22 : vector<8x256xf32>
    %120 = arith.addf %119, %109 : vector<8x256xf32>
    %121 = arith.addf %120, %112 : vector<8x256xf32>
    %122 = arith.addf %121, %97 : vector<8x256xf32>
    %123 = arith.addf %122, %115 : vector<8x256xf32>
    %cst_58 = arith.constant 0xFF800000 : f32
    %124 = vector.broadcast %cst_58 : f32 to vector<8x256xf32>
    %125 = arith.select %4, %124, %92 : vector<8x256xi1>, vector<8x256xf32>
    %cst_59 = arith.constant 0xFF800000 : f32
    %126 = vector.broadcast %cst_59 : f32 to vector<8x256xf32>
    %127 = arith.select %6, %126, %93 : vector<8x256xi1>, vector<8x256xf32>
    %128 = arith.maximumf %125, %127 : vector<8x256xf32>
    %129 = arith.maximumf %22, %128 : vector<8x256xf32>
    %c1_i32_60 = arith.constant 1 : i32
    %130 = tpu.dynamic_rotate %129 by %c1_i32_60 dim 1 : vector<8x256xf32>, i32 -> vector<8x256xf32>
    %cst_61 = arith.constant 0xFF800000 : f32
    %131 = vector.broadcast %cst_61 : f32 to vector<8x256xf32>
    %132 = arith.select %8, %131, %130 : vector<8x256xi1>, vector<8x256xf32>
    %c255_i32_62 = arith.constant 255 : i32
    %133 = tpu.dynamic_rotate %129 by %c255_i32_62 dim 1 : vector<8x256xf32>, i32 -> vector<8x256xf32>
    %cst_63 = arith.constant 0xFF800000 : f32
    %134 = vector.broadcast %cst_63 : f32 to vector<8x256xf32>
    %135 = arith.select %10, %134, %133 : vector<8x256xi1>, vector<8x256xf32>
    %136 = arith.maximumf %132, %135 : vector<8x256xf32>
    %137 = arith.maximumf %129, %136 : vector<8x256xf32>
    %138 = tpu.concatenate %100, %95, %103, %106, %22, %109, %112, %97, %115 in 0 : vector<8x256xf32>, vector<8x256xf32>, vector<8x256xf32>, vector<8x256xf32>, vector<8x256xf32>, vector<8x256xf32>, vector<8x256xf32>, vector<8x256xf32>, vector<8x256xf32> -> vector<72x256xf32>
    %139 = arith.truncf %138 : vector<72x256xf32> to vector<72x256xbf16>
    %c1_64 = arith.constant 1 : index
    %c0_65 = arith.constant 0 : index
    %c0_66 = arith.constant 0 : index
    %140 = vector.load %arg6[%c1_64, %c0_65, %c0_66] : memref<5x8x72xf32, #tpu.memory_space<vmem>>, vector<1x8x72xf32>
    %141 = vector.shape_cast %140 : vector<1x8x72xf32> to vector<8x72xf32>
    %142 = arith.truncf %141 : vector<8x72xf32> to vector<8x72xbf16>
    %cst_67 = arith.constant dense<0.000000e+00> : vector<8x256xf32>
    %143 = tpu.matmul %142, %139, %cst_67 {dimension_numbers = #tpu.dot_dimension_numbers<[1], [0], [0], [1], [0, 0, 1, 1], [], []>} : vector<8x72xbf16>, vector<72x256xbf16>, vector<8x256xf32> -> vector<8x256xf32>
    %cst_68 = arith.constant 0.000000e+00 : f32
    %144 = vector.broadcast %cst_68 : f32 to vector<8x256xf32>
    %145 = arith.maximumf %143, %144 : vector<8x256xf32>
    %c1_69 = arith.constant 1 : index
    %c1_70 = arith.constant 1 : index
    %146 = memref.load %arg1[%c1_69, %c1_70] : memref<5x5xf32, #tpu.memory_space<smem>>
    %147 = vector.broadcast %146 : f32 to vector<8x256xf32>
    %148 = arith.mulf %147, %22 : vector<8x256xf32>
    %c1_71 = arith.constant 1 : index
    %c2_72 = arith.constant 2 : index
    %149 = memref.load %arg1[%c1_71, %c2_72] : memref<5x5xf32, #tpu.memory_space<smem>>
    %150 = vector.broadcast %149 : f32 to vector<8x256xf32>
    %151 = arith.mulf %150, %123 : vector<8x256xf32>
    %152 = arith.addf %148, %151 : vector<8x256xf32>
    %c1_73 = arith.constant 1 : index
    %c3_74 = arith.constant 3 : index
    %153 = memref.load %arg1[%c1_73, %c3_74] : memref<5x5xf32, #tpu.memory_space<smem>>
    %154 = vector.broadcast %153 : f32 to vector<8x256xf32>
    %155 = arith.mulf %154, %137 : vector<8x256xf32>
    %156 = arith.addf %152, %155 : vector<8x256xf32>
    %c1_75 = arith.constant 1 : index
    %c4_76 = arith.constant 4 : index
    %157 = memref.load %arg1[%c1_75, %c4_76] : memref<5x5xf32, #tpu.memory_space<smem>>
    %158 = vector.broadcast %157 : f32 to vector<8x256xf32>
    %159 = arith.mulf %158, %145 : vector<8x256xf32>
    %160 = arith.addf %156, %159 : vector<8x256xf32>
    %161 = arith.addf %91, %160 : vector<8x256xf32>
    %c16_i32_77 = arith.constant 16 : i32
    %162 = tpu.dynamic_rotate %16 by %c16_i32_77 dim 1 : vector<8x256xf32>, i32 -> vector<8x256xf32>
    %c240_i32_78 = arith.constant 240 : i32
    %163 = tpu.dynamic_rotate %16 by %c240_i32_78 dim 1 : vector<8x256xf32>, i32 -> vector<8x256xf32>
    %cst_79 = arith.constant 0.000000e+00 : f32
    %164 = vector.broadcast %cst_79 : f32 to vector<8x256xf32>
    %165 = arith.select %4, %164, %162 : vector<8x256xi1>, vector<8x256xf32>
    %cst_80 = arith.constant 0.000000e+00 : f32
    %166 = vector.broadcast %cst_80 : f32 to vector<8x256xf32>
    %167 = arith.select %6, %166, %163 : vector<8x256xi1>, vector<8x256xf32>
    %c1_i32_81 = arith.constant 1 : i32
    %168 = tpu.dynamic_rotate %165 by %c1_i32_81 dim 1 : vector<8x256xf32>, i32 -> vector<8x256xf32>
    %cst_82 = arith.constant 0.000000e+00 : f32
    %169 = vector.broadcast %cst_82 : f32 to vector<8x256xf32>
    %170 = arith.select %8, %169, %168 : vector<8x256xi1>, vector<8x256xf32>
    %c255_i32_83 = arith.constant 255 : i32
    %171 = tpu.dynamic_rotate %165 by %c255_i32_83 dim 1 : vector<8x256xf32>, i32 -> vector<8x256xf32>
    %cst_84 = arith.constant 0.000000e+00 : f32
    %172 = vector.broadcast %cst_84 : f32 to vector<8x256xf32>
    %173 = arith.select %10, %172, %171 : vector<8x256xi1>, vector<8x256xf32>
    %c1_i32_85 = arith.constant 1 : i32
    %174 = tpu.dynamic_rotate %16 by %c1_i32_85 dim 1 : vector<8x256xf32>, i32 -> vector<8x256xf32>
    %cst_86 = arith.constant 0.000000e+00 : f32
    %175 = vector.broadcast %cst_86 : f32 to vector<8x256xf32>
    %176 = arith.select %8, %175, %174 : vector<8x256xi1>, vector<8x256xf32>
    %c255_i32_87 = arith.constant 255 : i32
    %177 = tpu.dynamic_rotate %16 by %c255_i32_87 dim 1 : vector<8x256xf32>, i32 -> vector<8x256xf32>
    %cst_88 = arith.constant 0.000000e+00 : f32
    %178 = vector.broadcast %cst_88 : f32 to vector<8x256xf32>
    %179 = arith.select %10, %178, %177 : vector<8x256xi1>, vector<8x256xf32>
    %c1_i32_89 = arith.constant 1 : i32
    %180 = tpu.dynamic_rotate %167 by %c1_i32_89 dim 1 : vector<8x256xf32>, i32 -> vector<8x256xf32>
    %cst_90 = arith.constant 0.000000e+00 : f32
    %181 = vector.broadcast %cst_90 : f32 to vector<8x256xf32>
    %182 = arith.select %8, %181, %180 : vector<8x256xi1>, vector<8x256xf32>
    %c255_i32_91 = arith.constant 255 : i32
    %183 = tpu.dynamic_rotate %167 by %c255_i32_91 dim 1 : vector<8x256xf32>, i32 -> vector<8x256xf32>
    %cst_92 = arith.constant 0.000000e+00 : f32
    %184 = vector.broadcast %cst_92 : f32 to vector<8x256xf32>
    %185 = arith.select %10, %184, %183 : vector<8x256xi1>, vector<8x256xf32>
    %186 = arith.addf %170, %165 : vector<8x256xf32>
    %187 = arith.addf %186, %173 : vector<8x256xf32>
    %188 = arith.addf %187, %176 : vector<8x256xf32>
    %189 = arith.addf %188, %16 : vector<8x256xf32>
    %190 = arith.addf %189, %179 : vector<8x256xf32>
    %191 = arith.addf %190, %182 : vector<8x256xf32>
    %192 = arith.addf %191, %167 : vector<8x256xf32>
    %193 = arith.addf %192, %185 : vector<8x256xf32>
    %cst_93 = arith.constant 0xFF800000 : f32
    %194 = vector.broadcast %cst_93 : f32 to vector<8x256xf32>
    %195 = arith.select %4, %194, %162 : vector<8x256xi1>, vector<8x256xf32>
    %cst_94 = arith.constant 0xFF800000 : f32
    %196 = vector.broadcast %cst_94 : f32 to vector<8x256xf32>
    %197 = arith.select %6, %196, %163 : vector<8x256xi1>, vector<8x256xf32>
    %198 = arith.maximumf %195, %197 : vector<8x256xf32>
    %199 = arith.maximumf %16, %198 : vector<8x256xf32>
    %c1_i32_95 = arith.constant 1 : i32
    %200 = tpu.dynamic_rotate %199 by %c1_i32_95 dim 1 : vector<8x256xf32>, i32 -> vector<8x256xf32>
    %cst_96 = arith.constant 0xFF800000 : f32
    %201 = vector.broadcast %cst_96 : f32 to vector<8x256xf32>
    %202 = arith.select %8, %201, %200 : vector<8x256xi1>, vector<8x256xf32>
    %c255_i32_97 = arith.constant 255 : i32
    %203 = tpu.dynamic_rotate %199 by %c255_i32_97 dim 1 : vector<8x256xf32>, i32 -> vector<8x256xf32>
    %cst_98 = arith.constant 0xFF800000 : f32
    %204 = vector.broadcast %cst_98 : f32 to vector<8x256xf32>
    %205 = arith.select %10, %204, %203 : vector<8x256xi1>, vector<8x256xf32>
    %206 = arith.maximumf %202, %205 : vector<8x256xf32>
    %207 = arith.maximumf %199, %206 : vector<8x256xf32>
    %208 = tpu.concatenate %170, %165, %173, %176, %16, %179, %182, %167, %185 in 0 : vector<8x256xf32>, vector<8x256xf32>, vector<8x256xf32>, vector<8x256xf32>, vector<8x256xf32>, vector<8x256xf32>, vector<8x256xf32>, vector<8x256xf32>, vector<8x256xf32> -> vector<72x256xf32>
    %209 = arith.truncf %208 : vector<72x256xf32> to vector<72x256xbf16>
    %c2_99 = arith.constant 2 : index
    %c0_100 = arith.constant 0 : index
    %c0_101 = arith.constant 0 : index
    %210 = vector.load %arg6[%c2_99, %c0_100, %c0_101] : memref<5x8x72xf32, #tpu.memory_space<vmem>>, vector<1x8x72xf32>
    %211 = vector.shape_cast %210 : vector<1x8x72xf32> to vector<8x72xf32>
    %212 = arith.truncf %211 : vector<8x72xf32> to vector<8x72xbf16>
    %cst_102 = arith.constant dense<0.000000e+00> : vector<8x256xf32>
    %213 = tpu.matmul %212, %209, %cst_102 {dimension_numbers = #tpu.dot_dimension_numbers<[1], [0], [0], [1], [0, 0, 1, 1], [], []>} : vector<8x72xbf16>, vector<72x256xbf16>, vector<8x256xf32> -> vector<8x256xf32>
    %cst_103 = arith.constant 0.000000e+00 : f32
    %214 = vector.broadcast %cst_103 : f32 to vector<8x256xf32>
    %215 = arith.maximumf %213, %214 : vector<8x256xf32>
    %c2_104 = arith.constant 2 : index
    %c1_105 = arith.constant 1 : index
    %216 = memref.load %arg1[%c2_104, %c1_105] : memref<5x5xf32, #tpu.memory_space<smem>>
    %217 = vector.broadcast %216 : f32 to vector<8x256xf32>
    %218 = arith.mulf %217, %16 : vector<8x256xf32>
    %c2_106 = arith.constant 2 : index
    %c2_107 = arith.constant 2 : index
    %219 = memref.load %arg1[%c2_106, %c2_107] : memref<5x5xf32, #tpu.memory_space<smem>>
    %220 = vector.broadcast %219 : f32 to vector<8x256xf32>
    %221 = arith.mulf %220, %193 : vector<8x256xf32>
    %222 = arith.addf %218, %221 : vector<8x256xf32>
    %c2_108 = arith.constant 2 : index
    %c3_109 = arith.constant 3 : index
    %223 = memref.load %arg1[%c2_108, %c3_109] : memref<5x5xf32, #tpu.memory_space<smem>>
    %224 = vector.broadcast %223 : f32 to vector<8x256xf32>
    %225 = arith.mulf %224, %207 : vector<8x256xf32>
    %226 = arith.addf %222, %225 : vector<8x256xf32>
    %c2_110 = arith.constant 2 : index
    %c4_111 = arith.constant 4 : index
    %227 = memref.load %arg1[%c2_110, %c4_111] : memref<5x5xf32, #tpu.memory_space<smem>>
    %228 = vector.broadcast %227 : f32 to vector<8x256xf32>
    %229 = arith.mulf %228, %215 : vector<8x256xf32>
    %230 = arith.addf %226, %229 : vector<8x256xf32>
    %c16_i32_112 = arith.constant 16 : i32
    %231 = tpu.dynamic_rotate %22 by %c16_i32_112 dim 1 : vector<8x256xf32>, i32 -> vector<8x256xf32>
    %c240_i32_113 = arith.constant 240 : i32
    %232 = tpu.dynamic_rotate %22 by %c240_i32_113 dim 1 : vector<8x256xf32>, i32 -> vector<8x256xf32>
    %cst_114 = arith.constant 0.000000e+00 : f32
    %233 = vector.broadcast %cst_114 : f32 to vector<8x256xf32>
    %234 = arith.select %4, %233, %231 : vector<8x256xi1>, vector<8x256xf32>
    %cst_115 = arith.constant 0.000000e+00 : f32
    %235 = vector.broadcast %cst_115 : f32 to vector<8x256xf32>
    %236 = arith.select %6, %235, %232 : vector<8x256xi1>, vector<8x256xf32>
    %c1_i32_116 = arith.constant 1 : i32
    %237 = tpu.dynamic_rotate %234 by %c1_i32_116 dim 1 : vector<8x256xf32>, i32 -> vector<8x256xf32>
    %cst_117 = arith.constant 0.000000e+00 : f32
    %238 = vector.broadcast %cst_117 : f32 to vector<8x256xf32>
    %239 = arith.select %8, %238, %237 : vector<8x256xi1>, vector<8x256xf32>
    %c255_i32_118 = arith.constant 255 : i32
    %240 = tpu.dynamic_rotate %234 by %c255_i32_118 dim 1 : vector<8x256xf32>, i32 -> vector<8x256xf32>
    %cst_119 = arith.constant 0.000000e+00 : f32
    %241 = vector.broadcast %cst_119 : f32 to vector<8x256xf32>
    %242 = arith.select %10, %241, %240 : vector<8x256xi1>, vector<8x256xf32>
    %c1_i32_120 = arith.constant 1 : i32
    %243 = tpu.dynamic_rotate %22 by %c1_i32_120 dim 1 : vector<8x256xf32>, i32 -> vector<8x256xf32>
    %cst_121 = arith.constant 0.000000e+00 : f32
    %244 = vector.broadcast %cst_121 : f32 to vector<8x256xf32>
    %245 = arith.select %8, %244, %243 : vector<8x256xi1>, vector<8x256xf32>
    %c255_i32_122 = arith.constant 255 : i32
    %246 = tpu.dynamic_rotate %22 by %c255_i32_122 dim 1 : vector<8x256xf32>, i32 -> vector<8x256xf32>
    %cst_123 = arith.constant 0.000000e+00 : f32
    %247 = vector.broadcast %cst_123 : f32 to vector<8x256xf32>
    %248 = arith.select %10, %247, %246 : vector<8x256xi1>, vector<8x256xf32>
    %c1_i32_124 = arith.constant 1 : i32
    %249 = tpu.dynamic_rotate %236 by %c1_i32_124 dim 1 : vector<8x256xf32>, i32 -> vector<8x256xf32>
    %cst_125 = arith.constant 0.000000e+00 : f32
    %250 = vector.broadcast %cst_125 : f32 to vector<8x256xf32>
    %251 = arith.select %8, %250, %249 : vector<8x256xi1>, vector<8x256xf32>
    %c255_i32_126 = arith.constant 255 : i32
    %252 = tpu.dynamic_rotate %236 by %c255_i32_126 dim 1 : vector<8x256xf32>, i32 -> vector<8x256xf32>
    %cst_127 = arith.constant 0.000000e+00 : f32
    %253 = vector.broadcast %cst_127 : f32 to vector<8x256xf32>
    %254 = arith.select %10, %253, %252 : vector<8x256xi1>, vector<8x256xf32>
    %255 = arith.addf %239, %234 : vector<8x256xf32>
    %256 = arith.addf %255, %242 : vector<8x256xf32>
    %257 = arith.addf %256, %245 : vector<8x256xf32>
    %258 = arith.addf %257, %22 : vector<8x256xf32>
    %259 = arith.addf %258, %248 : vector<8x256xf32>
    %260 = arith.addf %259, %251 : vector<8x256xf32>
    %261 = arith.addf %260, %236 : vector<8x256xf32>
    %262 = arith.addf %261, %254 : vector<8x256xf32>
    %cst_128 = arith.constant 0xFF800000 : f32
    %263 = vector.broadcast %cst_128 : f32 to vector<8x256xf32>
    %264 = arith.select %4, %263, %231 : vector<8x256xi1>, vector<8x256xf32>
    %cst_129 = arith.constant 0xFF800000 : f32
    %265 = vector.broadcast %cst_129 : f32 to vector<8x256xf32>
    %266 = arith.select %6, %265, %232 : vector<8x256xi1>, vector<8x256xf32>
    %267 = arith.maximumf %264, %266 : vector<8x256xf32>
    %268 = arith.maximumf %22, %267 : vector<8x256xf32>
    %c1_i32_130 = arith.constant 1 : i32
    %269 = tpu.dynamic_rotate %268 by %c1_i32_130 dim 1 : vector<8x256xf32>, i32 -> vector<8x256xf32>
    %cst_131 = arith.constant 0xFF800000 : f32
    %270 = vector.broadcast %cst_131 : f32 to vector<8x256xf32>
    %271 = arith.select %8, %270, %269 : vector<8x256xi1>, vector<8x256xf32>
    %c255_i32_132 = arith.constant 255 : i32
    %272 = tpu.dynamic_rotate %268 by %c255_i32_132 dim 1 : vector<8x256xf32>, i32 -> vector<8x256xf32>
    %cst_133 = arith.constant 0xFF800000 : f32
    %273 = vector.broadcast %cst_133 : f32 to vector<8x256xf32>
    %274 = arith.select %10, %273, %272 : vector<8x256xi1>, vector<8x256xf32>
    %275 = arith.maximumf %271, %274 : vector<8x256xf32>
    %276 = arith.maximumf %268, %275 : vector<8x256xf32>
    %277 = tpu.concatenate %239, %234, %242, %245, %22, %248, %251, %236, %254 in 0 : vector<8x256xf32>, vector<8x256xf32>, vector<8x256xf32>, vector<8x256xf32>, vector<8x256xf32>, vector<8x256xf32>, vector<8x256xf32>, vector<8x256xf32>, vector<8x256xf32> -> vector<72x256xf32>
    %278 = arith.truncf %277 : vector<72x256xf32> to vector<72x256xbf16>
    %c3_134 = arith.constant 3 : index
    %c0_135 = arith.constant 0 : index
    %c0_136 = arith.constant 0 : index
    %279 = vector.load %arg6[%c3_134, %c0_135, %c0_136] : memref<5x8x72xf32, #tpu.memory_space<vmem>>, vector<1x8x72xf32>
    %280 = vector.shape_cast %279 : vector<1x8x72xf32> to vector<8x72xf32>
    %281 = arith.truncf %280 : vector<8x72xf32> to vector<8x72xbf16>
    %cst_137 = arith.constant dense<0.000000e+00> : vector<8x256xf32>
    %282 = tpu.matmul %281, %278, %cst_137 {dimension_numbers = #tpu.dot_dimension_numbers<[1], [0], [0], [1], [0, 0, 1, 1], [], []>} : vector<8x72xbf16>, vector<72x256xbf16>, vector<8x256xf32> -> vector<8x256xf32>
    %cst_138 = arith.constant 0.000000e+00 : f32
    %283 = vector.broadcast %cst_138 : f32 to vector<8x256xf32>
    %284 = arith.maximumf %282, %283 : vector<8x256xf32>
    %c3_139 = arith.constant 3 : index
    %c1_140 = arith.constant 1 : index
    %285 = memref.load %arg1[%c3_139, %c1_140] : memref<5x5xf32, #tpu.memory_space<smem>>
    %286 = vector.broadcast %285 : f32 to vector<8x256xf32>
    %287 = arith.mulf %286, %22 : vector<8x256xf32>
    %c3_141 = arith.constant 3 : index
    %c2_142 = arith.constant 2 : index
    %288 = memref.load %arg1[%c3_141, %c2_142] : memref<5x5xf32, #tpu.memory_space<smem>>
    %289 = vector.broadcast %288 : f32 to vector<8x256xf32>
    %290 = arith.mulf %289, %262 : vector<8x256xf32>
    %291 = arith.addf %287, %290 : vector<8x256xf32>
    %c3_143 = arith.constant 3 : index
    %c3_144 = arith.constant 3 : index
    %292 = memref.load %arg1[%c3_143, %c3_144] : memref<5x5xf32, #tpu.memory_space<smem>>
    %293 = vector.broadcast %292 : f32 to vector<8x256xf32>
    %294 = arith.mulf %293, %276 : vector<8x256xf32>
    %295 = arith.addf %291, %294 : vector<8x256xf32>
    %c3_145 = arith.constant 3 : index
    %c4_146 = arith.constant 4 : index
    %296 = memref.load %arg1[%c3_145, %c4_146] : memref<5x5xf32, #tpu.memory_space<smem>>
    %297 = vector.broadcast %296 : f32 to vector<8x256xf32>
    %298 = arith.mulf %297, %284 : vector<8x256xf32>
    %299 = arith.addf %295, %298 : vector<8x256xf32>
    %300 = arith.addf %230, %299 : vector<8x256xf32>
    %c16_i32_147 = arith.constant 16 : i32
    %301 = tpu.dynamic_rotate %161 by %c16_i32_147 dim 1 : vector<8x256xf32>, i32 -> vector<8x256xf32>
    %c240_i32_148 = arith.constant 240 : i32
    %302 = tpu.dynamic_rotate %161 by %c240_i32_148 dim 1 : vector<8x256xf32>, i32 -> vector<8x256xf32>
    %cst_149 = arith.constant 0.000000e+00 : f32
    %303 = vector.broadcast %cst_149 : f32 to vector<8x256xf32>
    %304 = arith.select %4, %303, %301 : vector<8x256xi1>, vector<8x256xf32>
    %cst_150 = arith.constant 0.000000e+00 : f32
    %305 = vector.broadcast %cst_150 : f32 to vector<8x256xf32>
    %306 = arith.select %6, %305, %302 : vector<8x256xi1>, vector<8x256xf32>
    %c1_i32_151 = arith.constant 1 : i32
    %307 = tpu.dynamic_rotate %304 by %c1_i32_151 dim 1 : vector<8x256xf32>, i32 -> vector<8x256xf32>
    %cst_152 = arith.constant 0.000000e+00 : f32
    %308 = vector.broadcast %cst_152 : f32 to vector<8x256xf32>
    %309 = arith.select %8, %308, %307 : vector<8x256xi1>, vector<8x256xf32>
    %c255_i32_153 = arith.constant 255 : i32
    %310 = tpu.dynamic_rotate %304 by %c255_i32_153 dim 1 : vector<8x256xf32>, i32 -> vector<8x256xf32>
    %cst_154 = arith.constant 0.000000e+00 : f32
    %311 = vector.broadcast %cst_154 : f32 to vector<8x256xf32>
    %312 = arith.select %10, %311, %310 : vector<8x256xi1>, vector<8x256xf32>
    %c1_i32_155 = arith.constant 1 : i32
    %313 = tpu.dynamic_rotate %161 by %c1_i32_155 dim 1 : vector<8x256xf32>, i32 -> vector<8x256xf32>
    %cst_156 = arith.constant 0.000000e+00 : f32
    %314 = vector.broadcast %cst_156 : f32 to vector<8x256xf32>
    %315 = arith.select %8, %314, %313 : vector<8x256xi1>, vector<8x256xf32>
    %c255_i32_157 = arith.constant 255 : i32
    %316 = tpu.dynamic_rotate %161 by %c255_i32_157 dim 1 : vector<8x256xf32>, i32 -> vector<8x256xf32>
    %cst_158 = arith.constant 0.000000e+00 : f32
    %317 = vector.broadcast %cst_158 : f32 to vector<8x256xf32>
    %318 = arith.select %10, %317, %316 : vector<8x256xi1>, vector<8x256xf32>
    %c1_i32_159 = arith.constant 1 : i32
    %319 = tpu.dynamic_rotate %306 by %c1_i32_159 dim 1 : vector<8x256xf32>, i32 -> vector<8x256xf32>
    %cst_160 = arith.constant 0.000000e+00 : f32
    %320 = vector.broadcast %cst_160 : f32 to vector<8x256xf32>
    %321 = arith.select %8, %320, %319 : vector<8x256xi1>, vector<8x256xf32>
    %c255_i32_161 = arith.constant 255 : i32
    %322 = tpu.dynamic_rotate %306 by %c255_i32_161 dim 1 : vector<8x256xf32>, i32 -> vector<8x256xf32>
    %cst_162 = arith.constant 0.000000e+00 : f32
    %323 = vector.broadcast %cst_162 : f32 to vector<8x256xf32>
    %324 = arith.select %10, %323, %322 : vector<8x256xi1>, vector<8x256xf32>
    %325 = arith.addf %309, %304 : vector<8x256xf32>
    %326 = arith.addf %325, %312 : vector<8x256xf32>
    %327 = arith.addf %326, %315 : vector<8x256xf32>
    %328 = arith.addf %327, %161 : vector<8x256xf32>
    %329 = arith.addf %328, %318 : vector<8x256xf32>
    %330 = arith.addf %329, %321 : vector<8x256xf32>
    %331 = arith.addf %330, %306 : vector<8x256xf32>
    %332 = arith.addf %331, %324 : vector<8x256xf32>
    %cst_163 = arith.constant 0xFF800000 : f32
    %333 = vector.broadcast %cst_163 : f32 to vector<8x256xf32>
    %334 = arith.select %4, %333, %301 : vector<8x256xi1>, vector<8x256xf32>
    %cst_164 = arith.constant 0xFF800000 : f32
    %335 = vector.broadcast %cst_164 : f32 to vector<8x256xf32>
    %336 = arith.select %6, %335, %302 : vector<8x256xi1>, vector<8x256xf32>
    %337 = arith.maximumf %334, %336 : vector<8x256xf32>
    %338 = arith.maximumf %161, %337 : vector<8x256xf32>
    %c1_i32_165 = arith.constant 1 : i32
    %339 = tpu.dynamic_rotate %338 by %c1_i32_165 dim 1 : vector<8x256xf32>, i32 -> vector<8x256xf32>
    %cst_166 = arith.constant 0xFF800000 : f32
    %340 = vector.broadcast %cst_166 : f32 to vector<8x256xf32>
    %341 = arith.select %8, %340, %339 : vector<8x256xi1>, vector<8x256xf32>
    %c255_i32_167 = arith.constant 255 : i32
    %342 = tpu.dynamic_rotate %338 by %c255_i32_167 dim 1 : vector<8x256xf32>, i32 -> vector<8x256xf32>
    %cst_168 = arith.constant 0xFF800000 : f32
    %343 = vector.broadcast %cst_168 : f32 to vector<8x256xf32>
    %344 = arith.select %10, %343, %342 : vector<8x256xi1>, vector<8x256xf32>
    %345 = arith.maximumf %341, %344 : vector<8x256xf32>
    %346 = arith.maximumf %338, %345 : vector<8x256xf32>
    %347 = tpu.concatenate %309, %304, %312, %315, %161, %318, %321, %306, %324 in 0 : vector<8x256xf32>, vector<8x256xf32>, vector<8x256xf32>, vector<8x256xf32>, vector<8x256xf32>, vector<8x256xf32>, vector<8x256xf32>, vector<8x256xf32>, vector<8x256xf32> -> vector<72x256xf32>
    %348 = arith.truncf %347 : vector<72x256xf32> to vector<72x256xbf16>
    %c4_169 = arith.constant 4 : index
    %c0_170 = arith.constant 0 : index
    %c0_171 = arith.constant 0 : index
    %349 = vector.load %arg6[%c4_169, %c0_170, %c0_171] : memref<5x8x72xf32, #tpu.memory_space<vmem>>, vector<1x8x72xf32>
    %350 = vector.shape_cast %349 : vector<1x8x72xf32> to vector<8x72xf32>
    %351 = arith.truncf %350 : vector<8x72xf32> to vector<8x72xbf16>
    %cst_172 = arith.constant dense<0.000000e+00> : vector<8x256xf32>
    %352 = tpu.matmul %351, %348, %cst_172 {dimension_numbers = #tpu.dot_dimension_numbers<[1], [0], [0], [1], [0, 0, 1, 1], [], []>} : vector<8x72xbf16>, vector<72x256xbf16>, vector<8x256xf32> -> vector<8x256xf32>
    %cst_173 = arith.constant 0.000000e+00 : f32
    %353 = vector.broadcast %cst_173 : f32 to vector<8x256xf32>
    %354 = arith.maximumf %352, %353 : vector<8x256xf32>
    %c4_174 = arith.constant 4 : index
    %c1_175 = arith.constant 1 : index
    %355 = memref.load %arg1[%c4_174, %c1_175] : memref<5x5xf32, #tpu.memory_space<smem>>
    %356 = vector.broadcast %355 : f32 to vector<8x256xf32>
    %357 = arith.mulf %356, %161 : vector<8x256xf32>
    %c4_176 = arith.constant 4 : index
    %c2_177 = arith.constant 2 : index
    %358 = memref.load %arg1[%c4_176, %c2_177] : memref<5x5xf32, #tpu.memory_space<smem>>
    %359 = vector.broadcast %358 : f32 to vector<8x256xf32>
    %360 = arith.mulf %359, %332 : vector<8x256xf32>
    %361 = arith.addf %357, %360 : vector<8x256xf32>
    %c4_178 = arith.constant 4 : index
    %c3_179 = arith.constant 3 : index
    %362 = memref.load %arg1[%c4_178, %c3_179] : memref<5x5xf32, #tpu.memory_space<smem>>
    %363 = vector.broadcast %362 : f32 to vector<8x256xf32>
    %364 = arith.mulf %363, %346 : vector<8x256xf32>
    %365 = arith.addf %361, %364 : vector<8x256xf32>
    %c4_180 = arith.constant 4 : index
    %c4_181 = arith.constant 4 : index
    %366 = memref.load %arg1[%c4_180, %c4_181] : memref<5x5xf32, #tpu.memory_space<smem>>
    %367 = vector.broadcast %366 : f32 to vector<8x256xf32>
    %368 = arith.mulf %367, %354 : vector<8x256xf32>
    %369 = arith.addf %365, %368 : vector<8x256xf32>
    %370 = arith.addf %300, %369 : vector<8x256xf32>
    %371 = tpu.concatenate %161, %370 in 0 : vector<8x256xf32>, vector<8x256xf32> -> vector<16x256xf32>
    %c0_182 = arith.constant 0 : index
    %c0_183 = arith.constant 0 : index
    %c0_184 = arith.constant 0 : index
    %372 = vector.load %arg7[%c0_182, %c0_183, %c0_184] : memref<1x16x256xf32, #tpu.memory_space<vmem>>, vector<1x16x256xf32>
    %373 = vector.shape_cast %372 : vector<1x16x256xf32> to vector<16x256xf32>
    %374 = vector.shape_cast %371 : vector<16x256xf32> to vector<1x16x256xf32>
    tpu.vector_store %arg7[%c0_182, %c0_183, %c0_184], %374 {strides = array<i32>} : memref<1x16x256xf32, #tpu.memory_space<vmem>>, vector<1x16x256xf32>,
    return
  }
  func.func @transform_0(%arg0: i32) -> (i32, i32) {
    %c0_i32 = arith.constant 0 : i32
    %c0_i32_0 = arith.constant 0 : i32
    %c0_i32_1 = arith.constant 0 : i32
    return %c0_i32, %c0_i32_0 : i32, i32
  }
  func.func @transform_1(%arg0: i32) -> (i32, i32, i32) {
    %c0_i32 = arith.constant 0 : i32
    %c0_i32_0 = arith.constant 0 : i32
    %c0_i32_1 = arith.constant 0 : i32
    return %arg0, %c0_i32, %c0_i32_0 : i32, i32, i32
  }
  func.func @transform_2(%arg0: i32) -> (i32, i32, i32) {
    %c0_i32 = arith.constant 0 : i32
    %c0_i32_0 = arith.constant 0 : i32
    %c0_i32_1 = arith.constant 0 : i32
    return %arg0, %c0_i32, %c0_i32_0 : i32, i32, i32
  }
  func.func @transform_3(%arg0: i32) -> (i32, i32) {
    %c0_i32 = arith.constant 0 : i32
    %c0_i32_0 = arith.constant 0 : i32
    %c0_i32_1 = arith.constant 0 : i32
    return %c0_i32, %c0_i32_0 : i32, i32
  }
  func.func @transform_4(%arg0: i32) -> (i32, i32) {
    %c0_i32 = arith.constant 0 : i32
    %c0_i32_0 = arith.constant 0 : i32
    %c0_i32_1 = arith.constant 0 : i32
    return %c0_i32, %c0_i32_0 : i32, i32
  }
  func.func @transform_5(%arg0: i32) -> (i32, i32, i32) {
    %c0_i32 = arith.constant 0 : i32
    %c0_i32_0 = arith.constant 0 : i32
    %c0_i32_1 = arith.constant 0 : i32
    %c0_i32_2 = arith.constant 0 : i32
    return %c0_i32, %c0_i32_0, %c0_i32_1 : i32, i32, i32
  }
  func.func @transform_6(%arg0: i32) -> (i32, i32, i32) {
    %c0_i32 = arith.constant 0 : i32
    %c0_i32_0 = arith.constant 0 : i32
    %c0_i32_1 = arith.constant 0 : i32
    return %arg0, %c0_i32, %c0_i32_0 : i32, i32, i32
  }
}

</mosaic_0001>

<llo_original>
// kernel: tpu_custom_call.1
$region0: #{tpu_custom_call.1}
  #allocation0 [shape = 'u32[]', space=smem, size = 0x4, offset = 0x4, fixed_abs, tag = 'smem constant byte address 0x4 - core index']
  #allocation1 [shape = 'u32[144,128]{1,0:T(1,128)}', space=vmem, size = 0x12000, scoped, tag = 'internal scratch']
  %s0 = inlined_call_operand.hbm [shape: f32[5,5], index: 0, kind: input, shape index: {}]
  %s1 = inlined_call_operand.hbm [shape: f32[2,8,256], index: 1, kind: input, shape index: {}]
  %s2 = inlined_call_operand.hbm [shape: f32[2,8,256], index: 2, kind: input, shape index: {}]
  %s3 = inlined_call_operand.vmem [shape: f32[8,8], index: 3, kind: input, shape index: {}]
  %s4 = inlined_call_operand.hbm [shape: f32[8,8], index: 4, kind: input, shape index: {}]
  %s5 = inlined_call_operand.hbm [shape: f32[5,8,72], index: 5, kind: input, shape index: {}]
  %s6 = inlined_call_operand.hbm [shape: f32[2,16,256], index: 6, kind: output, shape index: {}]
  %s7 = sld [smem:[#allocation0]]
  $region77: #{tpu_custom_call.1} parent=0
    _
  %s9 = ssub.s32 1, %s7
  %s10 = scalar_select 0, %s9, %s7
  $region1: #{tpu_custom_call.1} parent=0
    #allocation2 [shape = 'u8[4096]{0}', space=smem, size = 0x1000, scoped, tag = 'input window, operand 0, single buffered']
    #allocation3 [shape = 's32[2]{0}', space=sflag, size = 0x8, scoped, tag = 'scoped memory for tpu_custom_call.1']
    #allocation4 [shape = 's32[2]{0}', space=sflag, size = 0x8, scoped, tag = 'scoped memory for tpu_custom_call.1']
    #allocation5 [shape = 's32[2]{0}', space=sflag, size = 0x8, scoped, tag = 'scoped memory for tpu_custom_call.1']
    #allocation6 [shape = 'u8[16384]{0}', space=vmem, size = 0x4000, scoped, tag = 'input window, operand 1']
    #allocation7 [shape = 'u8[16384]{0}', space=vmem, size = 0x4000, scoped, tag = 'input window, operand 2']
    #allocation8 [shape = 's32[2]{0}', space=sflag, size = 0x8, scoped, tag = 'scoped memory for tpu_custom_call.1']
    #allocation9 [shape = 'u8[4096]{0}', space=vmem, size = 0x1000, scoped, tag = 'input window, operand 4, single buffered']
    #allocation10 [shape = 'u8[20480]{0}', space=vmem, size = 0x5000, scoped, tag = 'input window, operand 5, single buffered']
    #allocation11 [shape = 's32[1]{0}', space=sflag, size = 0x4, scoped, tag = 'scoped memory for tpu_custom_call.1']
    #allocation12 [shape = 'u8[32768]{0}', space=vmem, size = 0x8000, scoped, tag = 'output window, operand 0']
    %11 = vsyncpa [#allocation5], 0
    %12 = vsyncpa [#allocation3], 0
    %s13 = scalar_lea.sflag [#allocation3], 1
    %14 = vsyncpa %s13, 0
    %15 = vsyncpa [#allocation8], 0
    %s16 = scalar_lea.sflag [#allocation8], 1
    %17 = vsyncpa %s16, 0
    %18 = vsyncpa [#allocation11], 0
    %19 = vsyncpa [#allocation4], 0
    %s20 = scalar_lea.sflag [#allocation4], 1
    %21 = vsyncpa %s20, 0
    loop: start=0, step=1, limit=4
    $region2: #{tpu_custom_call.1} parent=1 // loop_pre_header
      _
    $region3: #{tpu_custom_call.1} parent=1 // loop_header
      %s23 = sphi 0, %s27
      %p24 = scmp.ge.s32.totalorder %s23, 4
      %s31 = sphi 0, %s31
      %s33 = sphi 0, %s31
      %s34 = sphi 0, %s33
      %s48 = sphi 0, %s34
      %s54 = sphi 0, %s56
      %s57 = sphi 0, %s54
      %s58 = sphi 0, %s57
      %s74 = sphi 0, %s58
      %s80 = sphi 0, %s82
      %s83 = sphi 0, %s80
      %s84 = sphi 0, %s83
      %s100 = sphi 0, %s84
      %s104 = sphi 0, %s104
      %s106 = sphi 0, %s104
      %s107 = sphi 0, %s106
      %s121 = sphi 0, %s107
      %s125 = sphi 0, %s125
      %s127 = sphi 0, %s125
      %s128 = sphi 0, %s127
      %s142 = sphi 0, %s128
      %s146 = sphi 0, %s146
      %s148 = sphi 0, %s146
      %s149 = sphi 0, %s148
      %s163 = sphi 0, %s149
      %s169 = sphi 0, %s171
      %s172 = sphi 0, %s169
      %s173 = sphi 0, %s172
      %s189 = sphi 0, %s173
    $region4: #{tpu_custom_call.1} parent=1 // loop_header_branch
      %26 = sbr.rel (%p24) target = $region8
    $region5: #{tpu_custom_call.1} parent=1 // loop_body
      %s28 = ssub.s32 %s23, 1
      %s29 = ssub.s32 %s23, 2
      %s30 = sadd.s32 %s23, 1
      %s32 = sadd.s32 %s31, 1
      %p35 = scmp.eq.s32.totalorder %s23, 1
      %p36 = scmp.ne.s32.totalorder %s31, %s33
      %p37 = scmp.eq.s32.totalorder %s23, 0
      %p38 = por %p36, %p37
      %p39 = scmp.ne.s32.totalorder %s31, %s33
      %p40 = scmp.eq.s32.totalorder %s28, 1
      %p41 = por %p39, %p40
      %p42 = scmp.ne.s32.totalorder %s33, %s34
      %p43 = scmp.eq.s32.totalorder %s28, 0
      %p44 = por %p42, %p43
      %p45 = scmp.ne.s32.totalorder %s33, %s34
      %p46 = scmp.eq.s32.totalorder %s29, 1
      %p47 = por %p45, %p46
      %p49 = scmp.ne.s32.totalorder %s34, %s48
      %p50 = scmp.eq.s32.totalorder %s29, 0
      %p51 = por %p49, %p50
      %s52 = ssub.s32 %s23, %s30
      %p53 = scmp.eq.s32.totalorder %s52, 0
      %s55 = sadd.s32 %s54, 1
      %s56 = scalar_select %p53, %s54, %s55
      %p59 = pneg %p53
      %p60 = scmp.eq.s32.totalorder %s23, 1
      %p61 = por %p59, %p60
      %p62 = scmp.ne.s32.totalorder %s54, %s57
      %p63 = scmp.eq.s32.totalorder %s23, 0
      %p64 = por %p62, %p63
      %p65 = scmp.ne.s32.totalorder %s54, %s57
      %p66 = scmp.eq.s32.totalorder %s28, 1
      %p67 = por %p65, %p66
      %p68 = scmp.ne.s32.totalorder %s57, %s58
      %p69 = scmp.eq.s32.totalorder %s28, 0
      %p70 = por %p68, %p69
      %p71 = scmp.ne.s32.totalorder %s57, %s58
      %p72 = scmp.eq.s32.totalorder %s29, 1
      %p73 = por %p71, %p72
      %p75 = scmp.ne.s32.totalorder %s58, %s74
      %p76 = scmp.eq.s32.totalorder %s29, 0
      %p77 = por %p75, %p76
      %s78 = ssub.s32 %s23, %s30
      %p79 = scmp.eq.s32.totalorder %s78, 0
      %s81 = sadd.s32 %s80, 1
      %s82 = scalar_select %p79, %s80, %s81
      %p85 = pneg %p79
      %p86 = scmp.eq.s32.totalorder %s23, 1
      %p87 = por %p85, %p86
      %p88 = scmp.ne.s32.totalorder %s80, %s83
      %p89 = scmp.eq.s32.totalorder %s23, 0
      %p90 = por %p88, %p89
      %p91 = scmp.ne.s32.totalorder %s80, %s83
      %p92 = scmp.eq.s32.totalorder %s28, 1
      %p93 = por %p91, %p92
      %p94 = scmp.ne.s32.totalorder %s83, %s84
      %p95 = scmp.eq.s32.totalorder %s28, 0
      %p96 = por %p94, %p95
      %p97 = scmp.ne.s32.totalorder %s83, %s84
      %p98 = scmp.eq.s32.totalorder %s29, 1
      %p99 = por %p97, %p98
      %p101 = scmp.ne.s32.totalorder %s84, %s100
      %p102 = scmp.eq.s32.totalorder %s29, 0
      %p103 = por %p101, %p102
      %s105 = sadd.s32 %s104, 1
      %p108 = scmp.eq.s32.totalorder %s23, 1
      %p109 = scmp.ne.s32.totalorder %s104, %s106
      %p110 = scmp.eq.s32.totalorder %s23, 0
      %p111 = por %p109, %p110
      %p112 = scmp.ne.s32.totalorder %s104, %s106
      %p113 = scmp.eq.s32.totalorder %s28, 1
      %p114 = por %p112, %p113
      %p115 = scmp.ne.s32.totalorder %s106, %s107
      %p116 = scmp.eq.s32.totalorder %s28, 0
      %p117 = por %p115, %p116
      %p118 = scmp.ne.s32.totalorder %s106, %s107
      %p119 = scmp.eq.s32.totalorder %s29, 1
      %p120 = por %p118, %p119
      %p122 = scmp.ne.s32.totalorder %s107, %s121
      %p123 = scmp.eq.s32.totalorder %s29, 0
      %p124 = por %p122, %p123
      %s126 = sadd.s32 %s125, 1
      %p129 = scmp.eq.s32.totalorder %s23, 1
      %p130 = scmp.ne.s32.totalorder %s125, %s127
      %p131 = scmp.eq.s32.totalorder %s23, 0
      %p132 = por %p130, %p131
      %p133 = scmp.ne.s32.totalorder %s125, %s127
      %p134 = scmp.eq.s32.totalorder %s28, 1
      %p135 = por %p133, %p134
      %p136 = scmp.ne.s32.totalorder %s127, %s128
      %p137 = scmp.eq.s32.totalorder %s28, 0
      %p138 = por %p136, %p137
      %p139 = scmp.ne.s32.totalorder %s127, %s128
      %p140 = scmp.eq.s32.totalorder %s29, 1
      %p141 = por %p139, %p140
      %p143 = scmp.ne.s32.totalorder %s128, %s142
      %p144 = scmp.eq.s32.totalorder %s29, 0
      %p145 = por %p143, %p144
      %s147 = sadd.s32 %s146, 1
      %p150 = scmp.eq.s32.totalorder %s23, 1
      %p151 = scmp.ne.s32.totalorder %s146, %s148
      %p152 = scmp.eq.s32.totalorder %s23, 0
      %p153 = por %p151, %p152
      %p154 = scmp.ne.s32.totalorder %s146, %s148
      %p155 = scmp.eq.s32.totalorder %s28, 1
      %p156 = por %p154, %p155
      %p157 = scmp.ne.s32.totalorder %s148, %s149
      %p158 = scmp.eq.s32.totalorder %s28, 0
      %p159 = por %p157, %p158
      %p160 = scmp.ne.s32.totalorder %s148, %s149
      %p161 = scmp.eq.s32.totalorder %s29, 1
      %p162 = por %p160, %p161
      %p164 = scmp.ne.s32.totalorder %s149, %s163
      %p165 = scmp.eq.s32.totalorder %s29, 0
      %p166 = por %p164, %p165
      %s167 = ssub.s32 %s23, %s30
      %p168 = scmp.eq.s32.totalorder %s167, 0
      %s170 = sadd.s32 %s169, 1
      %s171 = scalar_select %p168, %s169, %s170
      %p174 = pneg %p168
      %p175 = scmp.eq.s32.totalorder %s23, 1
      %p176 = por %p174, %p175
      %p177 = scmp.ne.s32.totalorder %s169, %s172
      %p178 = scmp.eq.s32.totalorder %s23, 0
      %p179 = por %p177, %p178
      %p180 = scmp.ne.s32.totalorder %s169, %s172
      %p181 = scmp.eq.s32.totalorder %s28, 1
      %p182 = por %p180, %p181
      %p183 = scmp.ne.s32.totalorder %s172, %s173
      %p184 = scmp.eq.s32.totalorder %s28, 0
      %p185 = por %p183, %p184
      %p186 = scmp.ne.s32.totalorder %s172, %s173
      %p187 = scmp.eq.s32.totalorder %s29, 1
      %p188 = por %p186, %p187
      %p190 = scmp.ne.s32.totalorder %s173, %s189
      %p191 = scmp.eq.s32.totalorder %s29, 0
      %p192 = por %p190, %p191
      %p193 = scmp.le.s32.totalorder 1, %s23
      %p194 = scmp.lt.s32.totalorder %s23, 3
      %p195 = pnand %p193, %p194
      %p196 = pneg %p195
      // Predicated region
      $region9: #{tpu_custom_call.1} parent=5 // pred_check
        _
      $region10: #{tpu_custom_call.1} parent=5 // pred_check_branch
        %198 = sbr.rel (%p195) target = $region12
      $region11: #{tpu_custom_call.1} parent=5 // pred_region
        %s199 = ssub.s32 %s23, 1
        // Predicated region
        $region13: #{tpu_custom_call.1} parent=11 // pred_check
          %p200 = pneg %p44
        $region14: #{tpu_custom_call.1} parent=11 // pred_check_branch
          %202 = sbr.rel (%p200) target = $region16
        $region15: #{tpu_custom_call.1} parent=11 // pred_region
          %s204 = ssub.s32 128, 128
          %205 = vsyncadd [#allocation5], %s204
          %208 = dma.hbm_to_smem %s0, 128, [#allocation2], [#allocation5]
        $region16: #{tpu_custom_call.1} parent=11 // pred_fallthru
          _
        // Predicated region
        $region17: #{tpu_custom_call.1} parent=11 // pred_check
          %p209 = pneg %p117
        $region18: #{tpu_custom_call.1} parent=11 // pred_check_branch
          %211 = sbr.rel (%p209) target = $region20
        $region19: #{tpu_custom_call.1} parent=11 // pred_region
          _
        $region20: #{tpu_custom_call.1} parent=11 // pred_fallthru
          _
        // Predicated region
        $region21: #{tpu_custom_call.1} parent=11 // pred_check
          %p212 = pneg %p138
        $region22: #{tpu_custom_call.1} parent=11 // pred_check_branch
          %214 = sbr.rel (%p212) target = $region24
        $region23: #{tpu_custom_call.1} parent=11 // pred_region
          %s216 = ssub.s32 128, 128
          %217 = vsyncadd [#allocation8], %s216
          %s219 = sshll.u32 [#allocation9], 4
          %s220 = int_to_ptr.vmem [resolvable:$true] %s219
          %222 = dma.hbm_to_vmem [thread:$0]  %s4, 128, %s220, [#allocation8]
        $region24: #{tpu_custom_call.1} parent=11 // pred_fallthru
          _
        // Predicated region
        $region25: #{tpu_custom_call.1} parent=11 // pred_check
          %p223 = pneg %p159
        $region26: #{tpu_custom_call.1} parent=11 // pred_check_branch
          %225 = sbr.rel (%p223) target = $region28
        $region27: #{tpu_custom_call.1} parent=11 // pred_region
          %s227 = ssub.s32 640, 640
          %228 = vsyncadd [#allocation11], %s227
          %s229 = sshll.u32 [#allocation10], 4
          %s230 = int_to_ptr.vmem [resolvable:$true] %s229
          %235 = dma.hbm_to_vmem [thread:$0]  %s5, 640, %s230, [#allocation11], 128, 128, 8
        $region28: #{tpu_custom_call.1} parent=11 // pred_fallthru
          _
      $region12: #{tpu_custom_call.1} parent=5 // pred_fallthru
        _
      %p236 = scmp.lt.s32.totalorder %s23, 2
      // Predicated region
      $region29: #{tpu_custom_call.1} parent=5 // pred_check
        %p237 = pneg %p236
      $region30: #{tpu_custom_call.1} parent=5 // pred_check_branch
        %239 = sbr.rel (%p237) target = $region32
      $region31: #{tpu_custom_call.1} parent=5 // pred_region
        // Predicated region
        $region33: #{tpu_custom_call.1} parent=31 // pred_check
          %p240 = pneg %p64
        $region34: #{tpu_custom_call.1} parent=31 // pred_check_branch
          %242 = sbr.rel (%p240) target = $region36
        $region35: #{tpu_custom_call.1} parent=31 // pred_region
          %s243 = sand.u32 %s54, 1
          %s244 = scalar_lea.sflag [#allocation3], %s243
          %s245 = sand.u32 %s54, 1
          %s246 = smul.addr %s245, 16
          %s247 = scalar_lea.vmem [#allocation6], %s246
          %s249 = ssub.s32 256, 256
          %250 = vsyncadd %s244, %s249
          %s251 = smul.addr %s23, 2
          %s252 = smul.addr %s251, 128
          %s253 = scalar_lea.hbm %s1, %s252
          %s255 = sshll.u32 %s247, 4
          %s256 = int_to_ptr.vmem [resolvable:$true] %s255
          %258 = dma.hbm_to_vmem [thread:$0]  %s253, 256, %s256, %s244
        $region36: #{tpu_custom_call.1} parent=31 // pred_fallthru
          _
        // Predicated region
        $region37: #{tpu_custom_call.1} parent=31 // pred_check
          %p259 = pneg %p90
        $region38: #{tpu_custom_call.1} parent=31 // pred_check_branch
          %261 = sbr.rel (%p259) target = $region40
        $region39: #{tpu_custom_call.1} parent=31 // pred_region
          %s262 = sand.u32 %s23, 1
          %s263 = scalar_lea.sflag [#allocation8], %s262
          %s264 = sand.u32 %s80, 1
          %s265 = smul.addr %s264, 16
          %s266 = scalar_lea.vmem [#allocation7], %s265
          %s268 = ssub.s32 256, 256
          %269 = vsyncadd %s263, %s268
          %s270 = smul.addr %s23, 2
          %s271 = smul.addr %s270, 128
          %s272 = scalar_lea.hbm %s2, %s271
          %s274 = sshll.u32 %s266, 4
          %s275 = int_to_ptr.vmem [resolvable:$true] %s274
          %277 = dma.hbm_to_vmem [thread:$0]  %s272, 256, %s275, %s263
        $region40: #{tpu_custom_call.1} parent=31 // pred_fallthru
          _
      $region32: #{tpu_custom_call.1} parent=5 // pred_fallthru
        _
      %p278 = scmp.le.s32.totalorder 1, %s23
      %p279 = scmp.lt.s32.totalorder %s23, 3
      %p280 = pnand %p278, %p279
      %p281 = pneg %p280
      // Predicated region
      $region41: #{tpu_custom_call.1} parent=5 // pred_check
        _
      $region42: #{tpu_custom_call.1} parent=5 // pred_check_branch
        %283 = sbr.rel (%p280) target = $region44
      $region43: #{tpu_custom_call.1} parent=5 // pred_region
        %s284 = ssub.s32 %s23, 1
        // Predicated region
        $region45: #{tpu_custom_call.1} parent=43 // pred_check
          %p285 = pneg %p44
        $region46: #{tpu_custom_call.1} parent=43 // pred_check_branch
          %287 = sbr.rel (%p285) target = $region48
        $region47: #{tpu_custom_call.1} parent=43 // pred_region
          %288 = dma.done [#allocation5], 128
        $region48: #{tpu_custom_call.1} parent=43 // pred_fallthru
          _
        %s289 = sand.u32 %s57, 1
        %s290 = scalar_lea.sflag [#allocation3], %s289
        %s291 = sand.u32 %s57, 1
        %s292 = smul.addr %s291, 16
        %s293 = scalar_lea.vmem [#allocation6], %s292
        // Predicated region
        $region49: #{tpu_custom_call.1} parent=43 // pred_check
          %p294 = pneg %p70
        $region50: #{tpu_custom_call.1} parent=43 // pred_check_branch
          %296 = sbr.rel (%p294) target = $region52
        $region51: #{tpu_custom_call.1} parent=43 // pred_region
          %297 = dma.done %s290, 256
        $region52: #{tpu_custom_call.1} parent=43 // pred_fallthru
          _
        %s298 = sand.u32 %s28, 1
        %s299 = scalar_lea.sflag [#allocation8], %s298
        %s300 = sand.u32 %s83, 1
        %s301 = smul.addr %s300, 16
        %s302 = scalar_lea.vmem [#allocation7], %s301
        // Predicated region
        $region53: #{tpu_custom_call.1} parent=43 // pred_check
          %p303 = pneg %p96
        $region54: #{tpu_custom_call.1} parent=43 // pred_check_branch
          %305 = sbr.rel (%p303) target = $region56
        $region55: #{tpu_custom_call.1} parent=43 // pred_region
          %306 = dma.done %s299, 256
        $region56: #{tpu_custom_call.1} parent=43 // pred_fallthru
          _
        // Predicated region
        $region57: #{tpu_custom_call.1} parent=43 // pred_check
          %p307 = pneg %p138
        $region58: #{tpu_custom_call.1} parent=43 // pred_check_branch
          %309 = sbr.rel (%p307) target = $region60
        $region59: #{tpu_custom_call.1} parent=43 // pred_region
          %310 = dma.done [#allocation8], 128
        $region60: #{tpu_custom_call.1} parent=43 // pred_fallthru
          _
        // Predicated region
        $region61: #{tpu_custom_call.1} parent=43 // pred_check
          %p311 = pneg %p159
        $region62: #{tpu_custom_call.1} parent=43 // pred_check_branch
          %313 = sbr.rel (%p311) target = $region64
        $region63: #{tpu_custom_call.1} parent=43 // pred_region
          %314 = dma.done [#allocation11], 640
        $region64: #{tpu_custom_call.1} parent=43 // pred_fallthru
          _
        %315 = sfence
        %p316 = pneg %p44
        %p317 = pneg %p41
        %s318 = sand.u32 %s57, 1
        %s319 = scalar_lea.sflag [#allocation3], %s318
        %s320 = sand.u32 %s57, 1
        %s321 = smul.addr %s320, 16
        %s322 = scalar_lea.vmem [#allocation6], %s321
        %p323 = pneg %p70
        %p324 = pneg %p67
        %s325 = sand.u32 %s28, 1
        %s326 = scalar_lea.sflag [#allocation8], %s325
        %s327 = sand.u32 %s83, 1
        %s328 = smul.addr %s327, 16
        %s329 = scalar_lea.vmem [#allocation7], %s328
        %p330 = pneg %p96
        %p331 = pneg %p93
        %p332 = pneg %p117
        %p333 = pneg %p114
        %p334 = pneg %p138
        %p335 = pneg %p135
        %p336 = pneg %p159
        %p337 = pneg %p156
        %p338 = pneg %p185
        %p339 = pneg %p182
        %s340 = sand.u32 %s172, 1
        %s341 = scalar_lea.sflag [#allocation4], %s340
        %s342 = sand.u32 %s172, 1
        %s343 = smul.addr %s342, 32
        %s344 = scalar_lea.vmem [#allocation12], %s343
        %v346 = vlaneseq
        %v347 = vand.u32 %v346, 127
        %v348 = vadd.s32 %v347, 128
        %v349 = vand.u32 %v347, 15
        %v350 = vand.u32 %v348, 15
        %vm351 = vcmp.lt.s32.totalorder %v347, 16
        %vm352 = vcmp.lt.s32.totalorder %v348, 16
        %vm353 = vcmp.ge.s32.totalorder %v347, 240
        %vm354 = vcmp.ge.s32.totalorder %v348, 240
        %vm355 = vcmp.eq.s32.totalorder %v349, 0
        %vm356 = vcmp.eq.s32.totalorder %v350, 0
        %vm357 = vcmp.eq.s32.totalorder %v349, 15
        %vm358 = vcmp.eq.s32.totalorder %v350, 15
        %v359 = vld [vmem:[%s3] sm:$0xff]
        %v360 = vld [vmem:[%s293] sm:$0xff]
        %v361 = vld [vmem:[%s293 + $0x8] sm:$0xff]
        %v362 = vmax.f32 %v360, 0.0
        %v363 = vmax.f32 %v361, 0.0
        %vm364 = vcmask 64512
        %v366 = vsel %vm364, %v359, 0
        %368 = vmatprep.subr.mxu0 %v363
        %369 = vmatpush1.msra.mxu0 %v362
        %370 = vmatprep.subr.mxu0 0.0
        %371 = vmatpush1.msra.mxu0 0.0
        %372 = vmatprep.subr.mxu0 0.0
        %373 = vmatpush1.msra.mxu0 0.0
        %374 = vmatprep.subr.mxu0 0.0
        %375 = vmatpush1.msra.mxu0 0.0
        %376 = vmatprep.subr.mxu0 0.0
        %377 = vmatpush1.msra.mxu0 0.0
        %378 = vmatprep.subr.mxu0 0.0
        %379 = vmatpush1.msra.mxu0 0.0
        %380 = vmatprep.subr.mxu0 0.0
        %381 = vmatpush1.msra.mxu0 0.0
        %382 = vmatprep.subr.mxu0 0.0
        %383 = vmatpush1.msra.mxu0 0.0
        %384 = vmatprep.subr.mxu0 0.0
        %385 = vmatpush1.msra.mxu0 0.0
        %386 = vmatprep.subr.mxu0 0.0
        %387 = vmatpush1.msra.mxu0 0.0
        %388 = vmatprep.subr.mxu0 0.0
        %389 = vmatpush1.msra.mxu0 0.0
        %390 = vmatprep.subr.mxu0 0.0
        %391 = vmatpush1.msra.mxu0 0.0
        %392 = vmatprep.subr.mxu0 0.0
        %393 = vmatpush1.msra.mxu0 0.0
        %394 = vmatprep.subr.mxu0 0.0
        %395 = vmatpush1.msra.mxu0 0.0
        %396 = vmatprep.subr.mxu0 0.0
        %397 = vmatpush1.msra.mxu0 0.0
        %398 = vmatprep.subr.mxu0 0.0
        %399 = vmatpush1.msra.mxu0 0.0
        %400 = vmatprep.subr.mxu0 0.0
        %401 = vmatpush1.msra.mxu0 0.0
        %402 = vmatprep.subr.mxu0 0.0
        %403 = vmatpush1.msra.mxu0 0.0
        %404 = vmatprep.subr.mxu0 0.0
        %405 = vmatpush1.msra.mxu0 0.0
        %406 = vmatprep.subr.mxu0 0.0
        %407 = vmatpush1.msra.mxu0 0.0
        %408 = vmatprep.subr.mxu0 0.0
        %409 = vmatpush1.msra.mxu0 0.0
        %410 = vmatprep.subr.mxu0 0.0
        %411 = vmatpush1.msra.mxu0 0.0
        %412 = vmatprep.subr.mxu0 0.0
        %413 = vmatpush1.msra.mxu0 0.0
        %414 = vmatprep.subr.mxu0 0.0
        %415 = vmatpush1.msra.mxu0 0.0
        %416 = vmatprep.subr.mxu0 0.0
        %417 = vmatpush1.msra.mxu0 0.0
        %418 = vmatprep.subr.mxu0 0.0
        %419 = vmatpush1.msra.mxu0 0.0
        %420 = vmatprep.subr.mxu0 0.0
        %421 = vmatpush1.msra.mxu0 0.0
        %422 = vmatprep.subr.mxu0 0.0
        %423 = vmatpush1.msra.mxu0 0.0
        %424 = vmatprep.subr.mxu0 0.0
        %425 = vmatpush1.msra.mxu0 0.0
        %426 = vmatprep.subr.mxu0 0.0
        %427 = vmatpush1.msra.mxu0 0.0
        %428 = vmatprep.subr.mxu0 0.0
        %429 = vmatpush1.msra.mxu0 0.0
        %430 = vmatprep.subr.mxu0 0.0
        %431 = vmatpush1.msra.mxu0 0.0
        %432 = vmatprep.mubr.f32.mxu0 0.0
        %433 = vmatmul.mubr.f32.gmra.mrb[0].mxu0 %v366
        %v434 = vpop.f32.mrb[0].mxu0
        %v435 = vadd.f32 0.0, %v434
        %v436 = vpop.f32.mrb[0].mxu0
        %v437 = vadd.f32 0.0, %v436
        %438 = vdwg.mxu0
        %v439 = vld [vmem:[#allocation9] sm:$0xff]
        %v440 = vld [vmem:[%s302] sm:$0xff]
        %v441 = vld [vmem:[%s302 + $0x8] sm:$0xff]
        %v442 = vmax.f32 %v440, 0.0
        %v443 = vmax.f32 %v441, 0.0
        %v445 = vsel %vm364, %v439, 0
        %447 = vmatprep.subr.mxu0 %v443
        %448 = vmatpush1.msra.mxu0 %v442
        %449 = vmatprep.subr.mxu0 0.0
        %450 = vmatpush1.msra.mxu0 0.0
        %451 = vmatprep.subr.mxu0 0.0
        %452 = vmatpush1.msra.mxu0 0.0
        %453 = vmatprep.subr.mxu0 0.0
        %454 = vmatpush1.msra.mxu0 0.0
        %455 = vmatprep.subr.mxu0 0.0
        %456 = vmatpush1.msra.mxu0 0.0
        %457 = vmatprep.subr.mxu0 0.0
        %458 = vmatpush1.msra.mxu0 0.0
        %459 = vmatprep.subr.mxu0 0.0
        %460 = vmatpush1.msra.mxu0 0.0
        %461 = vmatprep.subr.mxu0 0.0
        %462 = vmatpush1.msra.mxu0 0.0
        %463 = vmatprep.subr.mxu0 0.0
        %464 = vmatpush1.msra.mxu0 0.0
        %465 = vmatprep.subr.mxu0 0.0
        %466 = vmatpush1.msra.mxu0 0.0
        %467 = vmatprep.subr.mxu0 0.0
        %468 = vmatpush1.msra.mxu0 0.0
        %469 = vmatprep.subr.mxu0 0.0
        %470 = vmatpush1.msra.mxu0 0.0
        %471 = vmatprep.subr.mxu0 0.0
        %472 = vmatpush1.msra.mxu0 0.0
        %473 = vmatprep.subr.mxu0 0.0
        %474 = vmatpush1.msra.mxu0 0.0
        %475 = vmatprep.subr.mxu0 0.0
        %476 = vmatpush1.msra.mxu0 0.0
        %477 = vmatprep.subr.mxu0 0.0
        %478 = vmatpush1.msra.mxu0 0.0
        %479 = vmatprep.subr.mxu0 0.0
        %480 = vmatpush1.msra.mxu0 0.0
        %481 = vmatprep.subr.mxu0 0.0
        %482 = vmatpush1.msra.mxu0 0.0
        %483 = vmatprep.subr.mxu0 0.0
        %484 = vmatpush1.msra.mxu0 0.0
        %485 = vmatprep.subr.mxu0 0.0
        %486 = vmatpush1.msra.mxu0 0.0
        %487 = vmatprep.subr.mxu0 0.0
        %488 = vmatpush1.msra.mxu0 0.0
        %489 = vmatprep.subr.mxu0 0.0
        %490 = vmatpush1.msra.mxu0 0.0
        %491 = vmatprep.subr.mxu0 0.0
        %492 = vmatpush1.msra.mxu0 0.0
        %493 = vmatprep.subr.mxu0 0.0
        %494 = vmatpush1.msra.mxu0 0.0
        %495 = vmatprep.subr.mxu0 0.0
        %496 = vmatpush1.msra.mxu0 0.0
        %497 = vmatprep.subr.mxu0 0.0
        %498 = vmatpush1.msra.mxu0 0.0
        %499 = vmatprep.subr.mxu0 0.0
        %500 = vmatpush1.msra.mxu0 0.0
        %501 = vmatprep.subr.mxu0 0.0
        %502 = vmatpush1.msra.mxu0 0.0
        %503 = vmatprep.subr.mxu0 0.0
        %504 = vmatpush1.msra.mxu0 0.0
        %505 = vmatprep.subr.mxu0 0.0
        %506 = vmatpush1.msra.mxu0 0.0
        %507 = vmatprep.subr.mxu0 0.0
        %508 = vmatpush1.msra.mxu0 0.0
        %509 = vmatprep.subr.mxu0 0.0
        %510 = vmatpush1.msra.mxu0 0.0
        %511 = vmatprep.mubr.f32.mxu0 0.0
        %512 = vmatmul.mubr.f32.gmra.mrb[0].mxu0 %v445
        %v513 = vpop.f32.mrb[0].mxu0
        %v514 = vadd.f32 0.0, %v513
        %v515 = vpop.f32.mrb[0].mxu0
        %v516 = vadd.f32 0.0, %v515
        %517 = vdwg.mxu0
        %518 = vrot.lane.b32.xlu0 %v435, 16
        %v519 = vpop.permute.xlu0 %518
        %520 = vrot.lane.b32.xlu0 %v437, 16
        %v521 = vpop.permute.xlu0 %520
        %v522 = vsel %vm351, %v519, %v521
        %v523 = vsel %vm351, %v521, %v519
        %524 = vrot.lane.b32.xlu0 %v435, 112
        %v525 = vpop.permute.xlu0 %524
        %526 = vrot.lane.b32.xlu0 %v437, 112
        %v527 = vpop.permute.xlu0 %526
        %vm528 = vcmp.lt.s32.totalorder %v347, 112
        %v529 = vsel %vm528, %v525, %v527
        %v530 = vsel %vm528, %v527, %v525
        %v531 = vsel %vm351, 0.0, %v523
        %v532 = vsel %vm352, 0.0, %v522
        %v533 = vsel %vm353, 0.0, %v529
        %v534 = vsel %vm354, 0.0, %v530
        %535 = vrot.lane.b32.xlu0 %v531, 1
        %v536 = vpop.permute.xlu0 %535
        %537 = vrot.lane.b32.xlu0 %v532, 1
        %v538 = vpop.permute.xlu0 %537
        %vm539 = vcmp.lt.s32.totalorder %v347, 1
        %v540 = vsel %vm539, %v536, %v538
        %v541 = vsel %vm539, %v538, %v536
        %v542 = vsel %vm355, 0.0, %v541
        %v543 = vsel %vm356, 0.0, %v540
        %544 = vrot.lane.b32.xlu0 %v531, 127
        %v545 = vpop.permute.xlu0 %544
        %546 = vrot.lane.b32.xlu0 %v532, 127
        %v547 = vpop.permute.xlu0 %546
        %vm548 = vcmp.lt.s32.totalorder %v347, 127
        %v549 = vsel %vm548, %v545, %v547
        %v550 = vsel %vm548, %v547, %v545
        %v551 = vsel %vm357, 0.0, %v549
        %v552 = vsel %vm358, 0.0, %v550
        %553 = vrot.lane.b32.xlu0 %v435, 1
        %v554 = vpop.permute.xlu0 %553
        %555 = vrot.lane.b32.xlu0 %v437, 1
        %v556 = vpop.permute.xlu0 %555
        %v557 = vsel %vm539, %v554, %v556
        %v558 = vsel %vm539, %v556, %v554
        %v559 = vsel %vm355, 0.0, %v558
        %v560 = vsel %vm356, 0.0, %v557
        %561 = vrot.lane.b32.xlu0 %v435, 127
        %v562 = vpop.permute.xlu0 %561
        %563 = vrot.lane.b32.xlu0 %v437, 127
        %v564 = vpop.permute.xlu0 %563
        %v565 = vsel %vm548, %v562, %v564
        %v566 = vsel %vm548, %v564, %v562
        %v567 = vsel %vm357, 0.0, %v565
        %v568 = vsel %vm358, 0.0, %v566
        %569 = vrot.lane.b32.xlu0 %v533, 1
        %v570 = vpop.permute.xlu0 %569
        %571 = vrot.lane.b32.xlu0 %v534, 1
        %v572 = vpop.permute.xlu0 %571
        %v573 = vsel %vm539, %v570, %v572
        %v574 = vsel %vm539, %v572, %v570
        %v575 = vsel %vm355, 0.0, %v574
        %v576 = vsel %vm356, 0.0, %v573
        %577 = vrot.lane.b32.xlu0 %v533, 127
        %v578 = vpop.permute.xlu0 %577
        %579 = vrot.lane.b32.xlu0 %v534, 127
        %v580 = vpop.permute.xlu0 %579
        %v581 = vsel %vm548, %v578, %v580
        %v582 = vsel %vm548, %v580, %v578
        %v583 = vsel %vm357, 0.0, %v581
        %v584 = vsel %vm358, 0.0, %v582
        %v585 = vadd.f32 %v542, %v531
        %v586 = vadd.f32 %v543, %v532
        %v587 = vadd.f32 %v585, %v551
        %v588 = vadd.f32 %v586, %v552
        %v589 = vadd.f32 %v587, %v559
        %v590 = vadd.f32 %v588, %v560
        %v591 = vadd.f32 %v589, %v435
        %v592 = vadd.f32 %v590, %v437
        %v593 = vadd.f32 %v591, %v567
        %v594 = vadd.f32 %v592, %v568
        %v595 = vadd.f32 %v593, %v575
        %v596 = vadd.f32 %v594, %v576
        %v597 = vadd.f32 %v595, %v533
        %v598 = vadd.f32 %v596, %v534
        %v599 = vadd.f32 %v597, %v583
        %v600 = vadd.f32 %v598, %v584
        %v601 = vsel %vm351, -inf, %v523
        %v602 = vsel %vm352, -inf, %v522
        %v603 = vsel %vm353, -inf, %v529
        %v604 = vsel %vm354, -inf, %v530
        %v605 = vmax.f32 %v601, %v603
        %v606 = vmax.f32 %v602, %v604
        %v607 = vmax.f32 %v435, %v605
        %v608 = vmax.f32 %v437, %v606
        %609 = vrot.lane.b32.xlu0 %v607, 1
        %v610 = vpop.permute.xlu0 %609
        %611 = vrot.lane.b32.xlu0 %v608, 1
        %v612 = vpop.permute.xlu0 %611
        %v613 = vsel %vm539, %v610, %v612
        %v614 = vsel %vm539, %v612, %v610
        %v615 = vsel %vm355, -inf, %v614
        %v616 = vsel %vm356, -inf, %v613
        %617 = vrot.lane.b32.xlu0 %v607, 127
        %v618 = vpop.permute.xlu0 %617
        %619 = vrot.lane.b32.xlu0 %v608, 127
        %v620 = vpop.permute.xlu0 %619
        %v621 = vsel %vm548, %v618, %v620
        %v622 = vsel %vm548, %v620, %v618
        %v623 = vsel %vm357, -inf, %v621
        %v624 = vsel %vm358, -inf, %v622
        %v625 = vmax.f32 %v615, %v623
        %v626 = vmax.f32 %v616, %v624
        %v627 = vmax.f32 %v607, %v625
        %v628 = vmax.f32 %v608, %v626
        %v629 = vpack.c.bf16 %v531, %v542
        %v630 = vpack.c.bf16 %v532, %v543
        %v631 = vpack.c.bf16 %v559, %v551
        %v632 = vpack.c.bf16 %v560, %v552
        %v633 = vpack.c.bf16 %v567, %v435
        %v634 = vpack.c.bf16 %v568, %v437
        %v635 = vpack.c.bf16 %v533, %v575
        %v636 = vpack.c.bf16 %v534, %v576
        %v637 = vpack.c.bf16 %v583, %v583
        %v638 = vpack.c.bf16 %v584, %v584
        %v639 = vld [vmem:[#allocation10] sm:$0xff]
        %v640 = vpack.c.bf16 %v639, %v639
        %vm641 = vcmask 588800
        %v643 = vsel %vm641, %v640, 0
        %vm645 = vcmask 1043456
        %v647 = vsel %vm645, %v637, 0
        %v650 = vsel %vm645, %v638, 0
        %652 = vmatprep.subr.bf16.mxu0 %v630
        %653 = vmatpush1.bf16.msra.mxu0 %v629
        %654 = vmatprep.subr.bf16.mxu0 %v632
        %655 = vmatpush1.bf16.msra.mxu0 %v631
        %656 = vmatprep.subr.bf16.mxu0 %v634
        %657 = vmatpush1.bf16.msra.mxu0 %v633
        %658 = vmatprep.subr.bf16.mxu0 %v636
        %659 = vmatpush1.bf16.msra.mxu0 %v635
        %660 = vmatprep.subr.bf16.mxu0 %v650
        %661 = vmatpush1.bf16.msra.mxu0 %v647
        %662 = vmatprep.subr.bf16.mxu0 0
        %663 = vmatpush1.bf16.msra.mxu0 0
        %664 = vmatprep.subr.bf16.mxu0 0
        %665 = vmatpush1.bf16.msra.mxu0 0
        %666 = vmatprep.subr.bf16.mxu0 0
        %667 = vmatpush1.bf16.msra.mxu0 0
        %668 = vmatprep.subr.bf16.mxu0 0
        %669 = vmatpush1.bf16.msra.mxu0 0
        %670 = vmatprep.subr.bf16.mxu0 0
        %671 = vmatpush1.bf16.msra.mxu0 0
        %672 = vmatprep.subr.bf16.mxu0 0
        %673 = vmatpush1.bf16.msra.mxu0 0
        %674 = vmatprep.subr.bf16.mxu0 0
        %675 = vmatpush1.bf16.msra.mxu0 0
        %676 = vmatprep.subr.bf16.mxu0 0
        %677 = vmatpush1.bf16.msra.mxu0 0
        %678 = vmatprep.subr.bf16.mxu0 0
        %679 = vmatpush1.bf16.msra.mxu0 0
        %680 = vmatprep.subr.bf16.mxu0 0
        %681 = vmatpush1.bf16.msra.mxu0 0
        %682 = vmatprep.subr.bf16.mxu0 0
        %683 = vmatpush1.bf16.msra.mxu0 0
        %684 = vmatprep.mubr.bf16.mxu0 0
        %685 = vmatmul.mubr.bf16.gmra.mrb[0].mxu0 %v643
        %v686 = vpop.f32.mrb[0].mxu0
        %v687 = vadd.f32 0.0, %v686
        %v688 = vpop.f32.mrb[0].mxu0
        %v689 = vadd.f32 0.0, %v688
        %v690 = vpop.f32.mrb[0].mxu0
        %v691 = vpop.f32.mrb[0].mxu0
        %692 = vdwg.mxu0
        %v693 = vmax.f32 %v687, 0.0
        %v694 = vmax.f32 %v689, 0.0
        %s695 = sld [smem:[#allocation2 + $0x1]]
        %v696 = vstv %s695
        %v697 = vmul.f32 %v696, %v435
        %v698 = vmul.f32 %v696, %v437
        %s699 = sld [smem:[#allocation2 + $0x2]]
        %v700 = vstv %s699
        %v701 = vmul.f32 %v700, %v599
        %v702 = vmul.f32 %v700, %v600
        %v703 = vadd.f32 %v697, %v701
        %v704 = vadd.f32 %v698, %v702
        %s705 = sld [smem:[#allocation2 + $0x3]]
        %v706 = vstv %s705
        %v707 = vmul.f32 %v706, %v627
        %v708 = vmul.f32 %v706, %v628
        %v709 = vadd.f32 %v703, %v707
        %v710 = vadd.f32 %v704, %v708
        %s711 = sld [smem:[#allocation2 + $0x4]]
        %v712 = vstv %s711
        %v713 = vmul.f32 %v712, %v693
        %v714 = vmul.f32 %v712, %v694
        %v715 = vadd.f32 %v709, %v713
        %v716 = vadd.f32 %v710, %v714
        %717 = vrot.lane.b32.xlu0 %v514, 16
        %v718 = vpop.permute.xlu0 %717
        %719 = vrot.lane.b32.xlu0 %v516, 16
        %v720 = vpop.permute.xlu0 %719
        %v721 = vsel %vm351, %v718, %v720
        %v722 = vsel %vm351, %v720, %v718
        %723 = vrot.lane.b32.xlu0 %v514, 112
        %v724 = vpop.permute.xlu0 %723
        %725 = vrot.lane.b32.xlu0 %v516, 112
        %v726 = vpop.permute.xlu0 %725
        %v727 = vsel %vm528, %v724, %v726
        %v728 = vsel %vm528, %v726, %v724
        %v729 = vsel %vm351, 0.0, %v722
        %v730 = vsel %vm352, 0.0, %v721
        %v731 = vsel %vm353, 0.0, %v727
        %v732 = vsel %vm354, 0.0, %v728
        %733 = vrot.lane.b32.xlu0 %v729, 1
        %v734 = vpop.permute.xlu0 %733
        %735 = vrot.lane.b32.xlu0 %v730, 1
        %v736 = vpop.permute.xlu0 %735
        %v737 = vsel %vm539, %v734, %v736
        %v738 = vsel %vm539, %v736, %v734
        %v739 = vsel %vm355, 0.0, %v738
        %v740 = vsel %vm356, 0.0, %v737
        %741 = vrot.lane.b32.xlu0 %v729, 127
        %v742 = vpop.permute.xlu0 %741
        %743 = vrot.lane.b32.xlu0 %v730, 127
        %v744 = vpop.permute.xlu0 %743
        %v745 = vsel %vm548, %v742, %v744
        %v746 = vsel %vm548, %v744, %v742
        %v747 = vsel %vm357, 0.0, %v745
        %v748 = vsel %vm358, 0.0, %v746
        %749 = vrot.lane.b32.xlu0 %v514, 1
        %v750 = vpop.permute.xlu0 %749
        %751 = vrot.lane.b32.xlu0 %v516, 1
        %v752 = vpop.permute.xlu0 %751
        %v753 = vsel %vm539, %v750, %v752
        %v754 = vsel %vm539, %v752, %v750
        %v755 = vsel %vm355, 0.0, %v754
        %v756 = vsel %vm356, 0.0, %v753
        %757 = vrot.lane.b32.xlu0 %v514, 127
        %v758 = vpop.permute.xlu0 %757
        %759 = vrot.lane.b32.xlu0 %v516, 127
        %v760 = vpop.permute.xlu0 %759
        %v761 = vsel %vm548, %v758, %v760
        %v762 = vsel %vm548, %v760, %v758
        %v763 = vsel %vm357, 0.0, %v761
        %v764 = vsel %vm358, 0.0, %v762
        %765 = vrot.lane.b32.xlu0 %v731, 1
        %v766 = vpop.permute.xlu0 %765
        %767 = vrot.lane.b32.xlu0 %v732, 1
        %v768 = vpop.permute.xlu0 %767
        %v769 = vsel %vm539, %v766, %v768
        %v770 = vsel %vm539, %v768, %v766
        %v771 = vsel %vm355, 0.0, %v770
        %v772 = vsel %vm356, 0.0, %v769
        %773 = vrot.lane.b32.xlu0 %v731, 127
        %v774 = vpop.permute.xlu0 %773
        %775 = vrot.lane.b32.xlu0 %v732, 127
        %v776 = vpop.permute.xlu0 %775
        %v777 = vsel %vm548, %v774, %v776
        %v778 = vsel %vm548, %v776, %v774
        %v779 = vsel %vm357, 0.0, %v777
        %v780 = vsel %vm358, 0.0, %v778
        %v781 = vadd.f32 %v739, %v729
        %v782 = vadd.f32 %v740, %v730
        %v783 = vadd.f32 %v781, %v747
        %v784 = vadd.f32 %v782, %v748
        %v785 = vadd.f32 %v783, %v755
        %v786 = vadd.f32 %v784, %v756
        %v787 = vadd.f32 %v785, %v514
        %v788 = vadd.f32 %v786, %v516
        %v789 = vadd.f32 %v787, %v763
        %v790 = vadd.f32 %v788, %v764
        %v791 = vadd.f32 %v789, %v771
        %v792 = vadd.f32 %v790, %v772
        %v793 = vadd.f32 %v791, %v731
        %v794 = vadd.f32 %v792, %v732
        %v795 = vadd.f32 %v793, %v779
        %v796 = vadd.f32 %v794, %v780
        %v797 = vsel %vm351, -inf, %v722
        %v798 = vsel %vm352, -inf, %v721
        %v799 = vsel %vm353, -inf, %v727
        %v800 = vsel %vm354, -inf, %v728
        %v801 = vmax.f32 %v797, %v799
        %v802 = vmax.f32 %v798, %v800
        %v803 = vmax.f32 %v514, %v801
        %v804 = vmax.f32 %v516, %v802
        %805 = vrot.lane.b32.xlu0 %v803, 1
        %v806 = vpop.permute.xlu0 %805
        %807 = vrot.lane.b32.xlu0 %v804, 1
        %v808 = vpop.permute.xlu0 %807
        %v809 = vsel %vm539, %v806, %v808
        %v810 = vsel %vm539, %v808, %v806
        %v811 = vsel %vm355, -inf, %v810
        %v812 = vsel %vm356, -inf, %v809
        %813 = vrot.lane.b32.xlu0 %v803, 127
        %v814 = vpop.permute.xlu0 %813
        %815 = vrot.lane.b32.xlu0 %v804, 127
        %v816 = vpop.permute.xlu0 %815
        %v817 = vsel %vm548, %v814, %v816
        %v818 = vsel %vm548, %v816, %v814
        %v819 = vsel %vm357, -inf, %v817
        %v820 = vsel %vm358, -inf, %v818
        %v821 = vmax.f32 %v811, %v819
        %v822 = vmax.f32 %v812, %v820
        %v823 = vmax.f32 %v803, %v821
        %v824 = vmax.f32 %v804, %v822
        %v825 = vpack.c.bf16 %v729, %v739
        %v826 = vpack.c.bf16 %v730, %v740
        %v827 = vpack.c.bf16 %v755, %v747
        %v828 = vpack.c.bf16 %v756, %v748
        %v829 = vpack.c.bf16 %v763, %v514
        %v830 = vpack.c.bf16 %v764, %v516
        %v831 = vpack.c.bf16 %v731, %v771
        %v832 = vpack.c.bf16 %v732, %v772
        %v833 = vpack.c.bf16 %v779, %v779
        %v834 = vpack.c.bf16 %v780, %v780
        %s835 = scalar_lea.vmem [#allocation10], 8
        %v836 = vld [vmem:[%s835] sm:$0xff]
        %v837 = vpack.c.bf16 %v836, %v836
        %v839 = vsel %vm641, %v837, 0
        %v842 = vsel %vm645, %v833, 0
        %v845 = vsel %vm645, %v834, 0
        %847 = vmatprep.subr.bf16.mxu0 %v826
        %848 = vmatpush1.bf16.msra.mxu0 %v825
        %849 = vmatprep.subr.bf16.mxu0 %v828
        %850 = vmatpush1.bf16.msra.mxu0 %v827
        %851 = vmatprep.subr.bf16.mxu0 %v830
        %852 = vmatpush1.bf16.msra.mxu0 %v829
        %853 = vmatprep.subr.bf16.mxu0 %v832
        %854 = vmatpush1.bf16.msra.mxu0 %v831
        %855 = vmatprep.subr.bf16.mxu0 %v845
        %856 = vmatpush1.bf16.msra.mxu0 %v842
        %857 = vmatprep.subr.bf16.mxu0 0
        %858 = vmatpush1.bf16.msra.mxu0 0
        %859 = vmatprep.subr.bf16.mxu0 0
        %860 = vmatpush1.bf16.msra.mxu0 0
        %861 = vmatprep.subr.bf16.mxu0 0
        %862 = vmatpush1.bf16.msra.mxu0 0
        %863 = vmatprep.subr.bf16.mxu0 0
        %864 = vmatpush1.bf16.msra.mxu0 0
        %865 = vmatprep.subr.bf16.mxu0 0
        %866 = vmatpush1.bf16.msra.mxu0 0
        %867 = vmatprep.subr.bf16.mxu0 0
        %868 = vmatpush1.bf16.msra.mxu0 0
        %869 = vmatprep.subr.bf16.mxu0 0
        %870 = vmatpush1.bf16.msra.mxu0 0
        %871 = vmatprep.subr.bf16.mxu0 0
        %872 = vmatpush1.bf16.msra.mxu0 0
        %873 = vmatprep.subr.bf16.mxu0 0
        %874 = vmatpush1.bf16.msra.mxu0 0
        %875 = vmatprep.subr.bf16.mxu0 0
        %876 = vmatpush1.bf16.msra.mxu0 0
        %877 = vmatprep.subr.bf16.mxu0 0
        %878 = vmatpush1.bf16.msra.mxu0 0
        %879 = vmatprep.mubr.bf16.mxu0 0
        %880 = vmatmul.mubr.bf16.gmra.mrb[0].mxu0 %v839
        %v881 = vpop.f32.mrb[0].mxu0
        %v882 = vadd.f32 0.0, %v881
        %v883 = vpop.f32.mrb[0].mxu0
        %v884 = vadd.f32 0.0, %v883
        %v885 = vpop.f32.mrb[0].mxu0
        %v886 = vpop.f32.mrb[0].mxu0
        %887 = vdwg.mxu0
        %v888 = vmax.f32 %v882, 0.0
        %v889 = vmax.f32 %v884, 0.0
        %s890 = sld [smem:[#allocation2 + $0x81]]
        %v891 = vstv %s890
        %v892 = vmul.f32 %v891, %v514
        %v893 = vmul.f32 %v891, %v516
        %s894 = sld [smem:[#allocation2 + $0x82]]
        %v895 = vstv %s894
        %v896 = vmul.f32 %v895, %v795
        %v897 = vmul.f32 %v895, %v796
        %v898 = vadd.f32 %v892, %v896
        %v899 = vadd.f32 %v893, %v897
        %s900 = sld [smem:[#allocation2 + $0x83]]
        %v901 = vstv %s900
        %v902 = vmul.f32 %v901, %v823
        %v903 = vmul.f32 %v901, %v824
        %v904 = vadd.f32 %v898, %v902
        %v905 = vadd.f32 %v899, %v903
        %s906 = sld [smem:[#allocation2 + $0x84]]
        %v907 = vstv %s906
        %v908 = vmul.f32 %v907, %v888
        %v909 = vmul.f32 %v907, %v889
        %v910 = vadd.f32 %v904, %v908
        %v911 = vadd.f32 %v905, %v909
        %v912 = vadd.f32 %v715, %v910
        %v913 = vadd.f32 %v716, %v911
        %s914 = scalar_lea.vmem [#allocation10], 16
        %v915 = vld [vmem:[%s914] sm:$0xff]
        %v916 = vpack.c.bf16 %v915, %v915
        %v918 = vsel %vm641, %v916, 0
        %920 = vmatprep.subr.bf16.mxu0 %v630
        %921 = vmatpush1.bf16.msra.mxu0 %v629
        %922 = vmatprep.subr.bf16.mxu0 %v632
        %923 = vmatpush1.bf16.msra.mxu0 %v631
        %924 = vmatprep.subr.bf16.mxu0 %v634
        %925 = vmatpush1.bf16.msra.mxu0 %v633
        %926 = vmatprep.subr.bf16.mxu0 %v636
        %927 = vmatpush1.bf16.msra.mxu0 %v635
        %928 = vmatprep.subr.bf16.mxu0 %v650
        %929 = vmatpush1.bf16.msra.mxu0 %v647
        %930 = vmatprep.subr.bf16.mxu0 0
        %931 = vmatpush1.bf16.msra.mxu0 0
        %932 = vmatprep.subr.bf16.mxu0 0
        %933 = vmatpush1.bf16.msra.mxu0 0
        %934 = vmatprep.subr.bf16.mxu0 0
        %935 = vmatpush1.bf16.msra.mxu0 0
        %936 = vmatprep.subr.bf16.mxu0 0
        %937 = vmatpush1.bf16.msra.mxu0 0
        %938 = vmatprep.subr.bf16.mxu0 0
        %939 = vmatpush1.bf16.msra.mxu0 0
        %940 = vmatprep.subr.bf16.mxu0 0
        %941 = vmatpush1.bf16.msra.mxu0 0
        %942 = vmatprep.subr.bf16.mxu0 0
        %943 = vmatpush1.bf16.msra.mxu0 0
        %944 = vmatprep.subr.bf16.mxu0 0
        %945 = vmatpush1.bf16.msra.mxu0 0
        %946 = vmatprep.subr.bf16.mxu0 0
        %947 = vmatpush1.bf16.msra.mxu0 0
        %948 = vmatprep.subr.bf16.mxu0 0
        %949 = vmatpush1.bf16.msra.mxu0 0
        %950 = vmatprep.subr.bf16.mxu0 0
        %951 = vmatpush1.bf16.msra.mxu0 0
        %952 = vmatprep.mubr.bf16.mxu0 0
        %953 = vmatmul.mubr.bf16.gmra.mrb[0].mxu0 %v918
        %v954 = vpop.f32.mrb[0].mxu0
        %v955 = vadd.f32 0.0, %v954
        %v956 = vpop.f32.mrb[0].mxu0
        %v957 = vadd.f32 0.0, %v956
        %v958 = vpop.f32.mrb[0].mxu0
        %v959 = vpop.f32.mrb[0].mxu0
        %960 = vdwg.mxu0
        %v961 = vmax.f32 %v955, 0.0
        %v962 = vmax.f32 %v957, 0.0
        %s963 = sld [smem:[#allocation2 + $0x101]]
        %v964 = vstv %s963
        %v965 = vmul.f32 %v964, %v435
        %v966 = vmul.f32 %v964, %v437
        %s967 = sld [smem:[#allocation2 + $0x102]]
        %v968 = vstv %s967
        %v969 = vmul.f32 %v968, %v599
        %v970 = vmul.f32 %v968, %v600
        %v971 = vadd.f32 %v965, %v969
        %v972 = vadd.f32 %v966, %v970
        %s973 = sld [smem:[#allocation2 + $0x103]]
        %v974 = vstv %s973
        %v975 = vmul.f32 %v974, %v627
        %v976 = vmul.f32 %v974, %v628
        %v977 = vadd.f32 %v971, %v975
        %v978 = vadd.f32 %v972, %v976
        %s979 = sld [smem:[#allocation2 + $0x104]]
        %v980 = vstv %s979
        %v981 = vmul.f32 %v980, %v961
        %v982 = vmul.f32 %v980, %v962
        %v983 = vadd.f32 %v977, %v981
        %v984 = vadd.f32 %v978, %v982
        %s985 = scalar_lea.vmem [#allocation10], 24
        %v986 = vld [vmem:[%s985] sm:$0xff]
        %v987 = vpack.c.bf16 %v986, %v986
        %v989 = vsel %vm641, %v987, 0
        %991 = vmatprep.subr.bf16.mxu0 %v826
        %992 = vmatpush1.bf16.msra.mxu0 %v825
        %993 = vmatprep.subr.bf16.mxu0 %v828
        %994 = vmatpush1.bf16.msra.mxu0 %v827
        %995 = vmatprep.subr.bf16.mxu0 %v830
        %996 = vmatpush1.bf16.msra.mxu0 %v829
        %997 = vmatprep.subr.bf16.mxu0 %v832
        %998 = vmatpush1.bf16.msra.mxu0 %v831
        %999 = vmatprep.subr.bf16.mxu0 %v845
        %1000 = vmatpush1.bf16.msra.mxu0 %v842
        %1001 = vmatprep.subr.bf16.mxu0 0
        %1002 = vmatpush1.bf16.msra.mxu0 0
        %1003 = vmatprep.subr.bf16.mxu0 0
        %1004 = vmatpush1.bf16.msra.mxu0 0
        %1005 = vmatprep.subr.bf16.mxu0 0
        %1006 = vmatpush1.bf16.msra.mxu0 0
        %1007 = vmatprep.subr.bf16.mxu0 0
        %1008 = vmatpush1.bf16.msra.mxu0 0
        %1009 = vmatprep.subr.bf16.mxu0 0
        %1010 = vmatpush1.bf16.msra.mxu0 0
        %1011 = vmatprep.subr.bf16.mxu0 0
        %1012 = vmatpush1.bf16.msra.mxu0 0
        %1013 = vmatprep.subr.bf16.mxu0 0
        %1014 = vmatpush1.bf16.msra.mxu0 0
        %1015 = vmatprep.subr.bf16.mxu0 0
        %1016 = vmatpush1.bf16.msra.mxu0 0
        %1017 = vmatprep.subr.bf16.mxu0 0
        %1018 = vmatpush1.bf16.msra.mxu0 0
        %1019 = vmatprep.subr.bf16.mxu0 0
        %1020 = vmatpush1.bf16.msra.mxu0 0
        %1021 = vmatprep.subr.bf16.mxu0 0
        %1022 = vmatpush1.bf16.msra.mxu0 0
        %1023 = vmatprep.mubr.bf16.mxu0 0
        %1024 = vmatmul.mubr.bf16.gmra.mrb[0].mxu0 %v989
        %v1025 = vpop.f32.mrb[0].mxu0
        %v1026 = vadd.f32 0.0, %v1025
        %v1027 = vpop.f32.mrb[0].mxu0
        %v1028 = vadd.f32 0.0, %v1027
        %v1029 = vpop.f32.mrb[0].mxu0
        %v1030 = vpop.f32.mrb[0].mxu0
        %1031 = vdwg.mxu0
        %v1032 = vmax.f32 %v1026, 0.0
        %v1033 = vmax.f32 %v1028, 0.0
        %s1034 = sld [smem:[#allocation2 + $0x181]]
        %v1035 = vstv %s1034
        %v1036 = vmul.f32 %v1035, %v514
        %v1037 = vmul.f32 %v1035, %v516
        %s1038 = sld [smem:[#allocation2 + $0x182]]
        %v1039 = vstv %s1038
        %v1040 = vmul.f32 %v1039, %v795
        %v1041 = vmul.f32 %v1039, %v796
        %v1042 = vadd.f32 %v1036, %v1040
        %v1043 = vadd.f32 %v1037, %v1041
        %s1044 = sld [smem:[#allocation2 + $0x183]]
        %v1045 = vstv %s1044
        %v1046 = vmul.f32 %v1045, %v823
        %v1047 = vmul.f32 %v1045, %v824
        %v1048 = vadd.f32 %v1042, %v1046
        %v1049 = vadd.f32 %v1043, %v1047
        %s1050 = sld [smem:[#allocation2 + $0x184]]
        %v1051 = vstv %s1050
        %v1052 = vmul.f32 %v1051, %v1032
        %v1053 = vmul.f32 %v1051, %v1033
        %v1054 = vadd.f32 %v1048, %v1052
        %v1055 = vadd.f32 %v1049, %v1053
        %v1056 = vadd.f32 %v983, %v1054
        %v1057 = vadd.f32 %v984, %v1055
        %1058 = vrot.lane.b32.xlu0 %v912, 16
        %v1059 = vpop.permute.xlu0 %1058
        %1060 = vrot.lane.b32.xlu0 %v913, 16
        %v1061 = vpop.permute.xlu0 %1060
        %v1062 = vsel %vm351, %v1059, %v1061
        %v1063 = vsel %vm351, %v1061, %v1059
        %1064 = vrot.lane.b32.xlu0 %v912, 112
        %v1065 = vpop.permute.xlu0 %1064
        %1066 = vrot.lane.b32.xlu0 %v913, 112
        %v1067 = vpop.permute.xlu0 %1066
        %v1068 = vsel %vm528, %v1065, %v1067
        %v1069 = vsel %vm528, %v1067, %v1065
        %v1070 = vsel %vm351, 0.0, %v1063
        %v1071 = vsel %vm352, 0.0, %v1062
        %v1072 = vsel %vm353, 0.0, %v1068
        %v1073 = vsel %vm354, 0.0, %v1069
        %1074 = vrot.lane.b32.xlu0 %v1070, 1
        %v1075 = vpop.permute.xlu0 %1074
        %1076 = vrot.lane.b32.xlu0 %v1071, 1
        %v1077 = vpop.permute.xlu0 %1076
        %v1078 = vsel %vm539, %v1075, %v1077
        %v1079 = vsel %vm539, %v1077, %v1075
        %v1080 = vsel %vm355, 0.0, %v1079
        %v1081 = vsel %vm356, 0.0, %v1078
        %1082 = vrot.lane.b32.xlu0 %v1070, 127
        %v1083 = vpop.permute.xlu0 %1082
        %1084 = vrot.lane.b32.xlu0 %v1071, 127
        %v1085 = vpop.permute.xlu0 %1084
        %v1086 = vsel %vm548, %v1083, %v1085
        %v1087 = vsel %vm548, %v1085, %v1083
        %v1088 = vsel %vm357, 0.0, %v1086
        %v1089 = vsel %vm358, 0.0, %v1087
        %1090 = vrot.lane.b32.xlu0 %v912, 1
        %v1091 = vpop.permute.xlu0 %1090
        %1092 = vrot.lane.b32.xlu0 %v913, 1
        %v1093 = vpop.permute.xlu0 %1092
        %v1094 = vsel %vm539, %v1091, %v1093
        %v1095 = vsel %vm539, %v1093, %v1091
        %v1096 = vsel %vm355, 0.0, %v1095
        %v1097 = vsel %vm356, 0.0, %v1094
        %1098 = vrot.lane.b32.xlu0 %v912, 127
        %v1099 = vpop.permute.xlu0 %1098
        %1100 = vrot.lane.b32.xlu0 %v913, 127
        %v1101 = vpop.permute.xlu0 %1100
        %v1102 = vsel %vm548, %v1099, %v1101
        %v1103 = vsel %vm548, %v1101, %v1099
        %v1104 = vsel %vm357, 0.0, %v1102
        %v1105 = vsel %vm358, 0.0, %v1103
        %1106 = vrot.lane.b32.xlu0 %v1072, 1
        %v1107 = vpop.permute.xlu0 %1106
        %1108 = vrot.lane.b32.xlu0 %v1073, 1
        %v1109 = vpop.permute.xlu0 %1108
        %v1110 = vsel %vm539, %v1107, %v1109
        %v1111 = vsel %vm539, %v1109, %v1107
        %v1112 = vsel %vm355, 0.0, %v1111
        %v1113 = vsel %vm356, 0.0, %v1110
        %1114 = vrot.lane.b32.xlu0 %v1072, 127
        %v1115 = vpop.permute.xlu0 %1114
        %1116 = vrot.lane.b32.xlu0 %v1073, 127
        %v1117 = vpop.permute.xlu0 %1116
        %v1118 = vsel %vm548, %v1115, %v1117
        %v1119 = vsel %vm548, %v1117, %v1115
        %v1120 = vsel %vm357, 0.0, %v1118
        %v1121 = vsel %vm358, 0.0, %v1119
        %v1122 = vadd.f32 %v1080, %v1070
        %v1123 = vadd.f32 %v1081, %v1071
        %v1124 = vadd.f32 %v1122, %v1088
        %v1125 = vadd.f32 %v1123, %v1089
        %v1126 = vadd.f32 %v1124, %v1096
        %v1127 = vadd.f32 %v1125, %v1097
        %v1128 = vadd.f32 %v1126, %v912
        %v1129 = vadd.f32 %v1127, %v913
        %v1130 = vadd.f32 %v1128, %v1104
        %v1131 = vadd.f32 %v1129, %v1105
        %v1132 = vadd.f32 %v1130, %v1112
        %v1133 = vadd.f32 %v1131, %v1113
        %v1134 = vadd.f32 %v1132, %v1072
        %v1135 = vadd.f32 %v1133, %v1073
        %v1136 = vadd.f32 %v1134, %v1120
        %v1137 = vadd.f32 %v1135, %v1121
        %v1138 = vsel %vm351, -inf, %v1063
        %v1139 = vsel %vm352, -inf, %v1062
        %v1140 = vsel %vm353, -inf, %v1068
        %v1141 = vsel %vm354, -inf, %v1069
        %v1142 = vmax.f32 %v1138, %v1140
        %v1143 = vmax.f32 %v1139, %v1141
        %v1144 = vmax.f32 %v912, %v1142
        %v1145 = vmax.f32 %v913, %v1143
        %1146 = vrot.lane.b32.xlu0 %v1144, 1
        %v1147 = vpop.permute.xlu0 %1146
        %1148 = vrot.lane.b32.xlu0 %v1145, 1
        %v1149 = vpop.permute.xlu0 %1148
        %v1150 = vsel %vm539, %v1147, %v1149
        %v1151 = vsel %vm539, %v1149, %v1147
        %v1152 = vsel %vm355, -inf, %v1151
        %v1153 = vsel %vm356, -inf, %v1150
        %1154 = vrot.lane.b32.xlu0 %v1144, 127
        %v1155 = vpop.permute.xlu0 %1154
        %1156 = vrot.lane.b32.xlu0 %v1145, 127
        %v1157 = vpop.permute.xlu0 %1156
        %v1158 = vsel %vm548, %v1155, %v1157
        %v1159 = vsel %vm548, %v1157, %v1155
        %v1160 = vsel %vm357, -inf, %v1158
        %v1161 = vsel %vm358, -inf, %v1159
        %v1162 = vmax.f32 %v1152, %v1160
        %v1163 = vmax.f32 %v1153, %v1161
        %v1164 = vmax.f32 %v1144, %v1162
        %v1165 = vmax.f32 %v1145, %v1163
        %v1166 = vpack.c.bf16 %v1070, %v1080
        %v1167 = vpack.c.bf16 %v1071, %v1081
        %v1168 = vpack.c.bf16 %v1096, %v1088
        %v1169 = vpack.c.bf16 %v1097, %v1089
        %v1170 = vpack.c.bf16 %v1104, %v912
        %v1171 = vpack.c.bf16 %v1105, %v913
        %v1172 = vpack.c.bf16 %v1072, %v1112
        %v1173 = vpack.c.bf16 %v1073, %v1113
        %v1174 = vpack.c.bf16 %v1120, %v1120
        %v1175 = vpack.c.bf16 %v1121, %v1121
        %s1176 = scalar_lea.vmem [#allocation10], 32
        %v1177 = vld [vmem:[%s1176] sm:$0xff]
        %v1178 = vpack.c.bf16 %v1177, %v1177
        %v1180 = vsel %vm641, %v1178, 0
        %v1183 = vsel %vm645, %v1174, 0
        %v1186 = vsel %vm645, %v1175, 0
        %1188 = vmatprep.subr.bf16.mxu0 %v1167
        %1189 = vmatpush1.bf16.msra.mxu0 %v1166
        %1190 = vmatprep.subr.bf16.mxu0 %v1169
        %1191 = vmatpush1.bf16.msra.mxu0 %v1168
        %1192 = vmatprep.subr.bf16.mxu0 %v1171
        %1193 = vmatpush1.bf16.msra.mxu0 %v1170
        %1194 = vmatprep.subr.bf16.mxu0 %v1173
        %1195 = vmatpush1.bf16.msra.mxu0 %v1172
        %1196 = vmatprep.subr.bf16.mxu0 %v1186
        %1197 = vmatpush1.bf16.msra.mxu0 %v1183
        %1198 = vmatprep.subr.bf16.mxu0 0
        %1199 = vmatpush1.bf16.msra.mxu0 0
        %1200 = vmatprep.subr.bf16.mxu0 0
        %1201 = vmatpush1.bf16.msra.mxu0 0
        %1202 = vmatprep.subr.bf16.mxu0 0
        %1203 = vmatpush1.bf16.msra.mxu0 0
        %1204 = vmatprep.subr.bf16.mxu0 0
        %1205 = vmatpush1.bf16.msra.mxu0 0
        %1206 = vmatprep.subr.bf16.mxu0 0
        %1207 = vmatpush1.bf16.msra.mxu0 0
        %1208 = vmatprep.subr.bf16.mxu0 0
        %1209 = vmatpush1.bf16.msra.mxu0 0
        %1210 = vmatprep.subr.bf16.mxu0 0
        %1211 = vmatpush1.bf16.msra.mxu0 0
        %1212 = vmatprep.subr.bf16.mxu0 0
        %1213 = vmatpush1.bf16.msra.mxu0 0
        %1214 = vmatprep.subr.bf16.mxu0 0
        %1215 = vmatpush1.bf16.msra.mxu0 0
        %1216 = vmatprep.subr.bf16.mxu0 0
        %1217 = vmatpush1.bf16.msra.mxu0 0
        %1218 = vmatprep.subr.bf16.mxu0 0
        %1219 = vmatpush1.bf16.msra.mxu0 0
        %1220 = vmatprep.mubr.bf16.mxu0 0
        %1221 = vmatmul.mubr.bf16.gmra.mrb[0].mxu0 %v1180
        %v1222 = vpop.f32.mrb[0].mxu0
        %v1223 = vadd.f32 0.0, %v1222
        %v1224 = vpop.f32.mrb[0].mxu0
        %v1225 = vadd.f32 0.0, %v1224
        %v1226 = vpop.f32.mrb[0].mxu0
        %v1227 = vpop.f32.mrb[0].mxu0
        %1228 = vdwg.mxu0
        %v1229 = vmax.f32 %v1223, 0.0
        %v1230 = vmax.f32 %v1225, 0.0
        %s1231 = sld [smem:[#allocation2 + $0x201]]
        %v1232 = vstv %s1231
        %v1233 = vmul.f32 %v1232, %v912
        %v1234 = vmul.f32 %v1232, %v913
        %s1235 = sld [smem:[#allocation2 + $0x202]]
        %v1236 = vstv %s1235
        %v1237 = vmul.f32 %v1236, %v1136
        %v1238 = vmul.f32 %v1236, %v1137
        %v1239 = vadd.f32 %v1233, %v1237
        %v1240 = vadd.f32 %v1234, %v1238
        %s1241 = sld [smem:[#allocation2 + $0x203]]
        %v1242 = vstv %s1241
        %v1243 = vmul.f32 %v1242, %v1164
        %v1244 = vmul.f32 %v1242, %v1165
        %v1245 = vadd.f32 %v1239, %v1243
        %v1246 = vadd.f32 %v1240, %v1244
        %s1247 = sld [smem:[#allocation2 + $0x204]]
        %v1248 = vstv %s1247
        %v1249 = vmul.f32 %v1248, %v1229
        %v1250 = vmul.f32 %v1248, %v1230
        %v1251 = vadd.f32 %v1245, %v1249
        %v1252 = vadd.f32 %v1246, %v1250
        %v1253 = vadd.f32 %v1056, %v1251
        %v1254 = vadd.f32 %v1057, %v1252
        %1255 = vst [vmem:[%s344] sm:$0xff] %v912
        %1256 = vst [vmem:[%s344 + $0x8] sm:$0xff] %v913
        %1257 = vst [vmem:[%s344 + $0x10] sm:$0xff] %v1253
        %1258 = vst [vmem:[%s344 + $0x18] sm:$0xff] %v1254
        %s1259 = sand.u32 %s172, 1
        %s1260 = scalar_lea.sflag [#allocation4], %s1259
        %s1261 = sand.u32 %s172, 1
        %s1262 = smul.addr %s1261, 32
        %s1263 = scalar_lea.vmem [#allocation12], %s1262
        // Predicated region
        $region65: #{tpu_custom_call.1} parent=43 // pred_check
          %p1264 = pneg %p182
        $region66: #{tpu_custom_call.1} parent=43 // pred_check_branch
          %1266 = sbr.rel (%p1264) target = $region68
        $region67: #{tpu_custom_call.1} parent=43 // pred_region
          %s1268 = ssub.s32 512, 512
          %1269 = vsyncadd %s1260, %s1268
          %s1270 = smul.addr %s28, 4
          %s1271 = smul.addr %s1270, 128
          %s1272 = scalar_lea.hbm %s6, %s1271
          %s1273 = sshll.u32 %s1263, 4
          %s1274 = int_to_ptr.vmem [resolvable:$true] %s1273
          %1279 = dma.vmem_to_hbm [thread:$0]  %s1274, 512, %s1272, %s1260, 256, 256, 16
        $region68: #{tpu_custom_call.1} parent=43 // pred_fallthru
          _
      $region44: #{tpu_custom_call.1} parent=5 // pred_fallthru
        _
      %p1280 = scmp.le.s32.totalorder 2, %s23
      // Predicated region
      $region69: #{tpu_custom_call.1} parent=5 // pred_check
        %p1281 = pneg %p1280
      $region70: #{tpu_custom_call.1} parent=5 // pred_check_branch
        %1283 = sbr.rel (%p1281) target = $region72
      $region71: #{tpu_custom_call.1} parent=5 // pred_region
        %s1284 = ssub.s32 %s23, 2
        // Predicated region
        $region73: #{tpu_custom_call.1} parent=71 // pred_check
          %p1285 = pneg %p188
        $region74: #{tpu_custom_call.1} parent=71 // pred_check_branch
          %1287 = sbr.rel (%p1285) target = $region76
        $region75: #{tpu_custom_call.1} parent=71 // pred_region
          %s1288 = sand.u32 %s173, 1
          %s1289 = scalar_lea.sflag [#allocation4], %s1288
          %s1290 = sand.u32 %s173, 1
          %s1291 = smul.addr %s1290, 32
          %s1292 = scalar_lea.vmem [#allocation12], %s1291
          %1293 = dma.done %s1289, 512
        $region76: #{tpu_custom_call.1} parent=71 // pred_fallthru
          _
      $region72: #{tpu_custom_call.1} parent=5 // pred_fallthru
        _
    $region6: #{tpu_custom_call.1} parent=1 // loop_footer
      %s27 = sadd.s32 1, %s23
    $region7: #{tpu_custom_call.1} parent=1 // loop_footer_branch
      %22 = sbr.rel target = $region3
    $region8: #{tpu_custom_call.1} parent=1 // loop_exit
      _
    %1294 = vsyncpa [#allocation3], 1
    %s1295 = scalar_lea.sflag [#allocation3], 1
    %1296 = vsyncpa %s1295, 1
    %1297 = vsyncpa [#allocation8], 1
    %s1298 = scalar_lea.sflag [#allocation8], 1
    %1299 = vsyncpa %s1298, 1
    %1300 = vsyncpa [#allocation11], 1
    %1301 = vsyncpa [#allocation4], 1
    %s1302 = scalar_lea.sflag [#allocation4], 1
    %1303 = vsyncpa %s1302, 1
    %1304 = vsyncpa [#allocation5], 1
    %s1305 = scalar_lea.sflag [#allocation5], 1
    %1306 = vsyncpa %s1305, 1

</llo_original>
